<compile_context>
chip_gen: v6e
topology: v6e:2x2x1
jax: 0.10.0
libtpu: 0.0.40
codegen_flags: <defaults>
</compile_context>

<pallas_src>
import jax
import jax.numpy as jnp
import numpy as np
from jax.experimental import pallas as pl
from jax.experimental.pallas import tpu as pltpu


# ----------------------------------------------------------------------------
# Pallas kernel: one grid step = one (batch block, time block) tile.
# ----------------------------------------------------------------------------
def _gru_block_kernel(
    x_ref,                    # (BB, TB, I)   input tile
    wi_ref,                   # (I, 3H)       fused input->gate weights
    bi_ref,                   # (1, 3H)       fused biases (b_ir+b_hr | b_iz+b_hz | b_in)
    wh_ref,                   # (H, 3H)       fused hidden->gate weights
    bhn_ref,                  # (1, H)        b_hn (stays inside r * (...))
    wfc_ref,                  # (H, TGT)      FC head weight
    bfc_ref,                  # (1, TGT)      FC head bias
    out_ref,                  # (BB, TB, TGT) logits tile
    h_ref,                    # VMEM (BB, H)  carried hidden state (across time blocks)
    hs_ref,                   # VMEM (BB, TB, H) per-block hidden states
):
    BB, TB, I = x_ref.shape
    H = wh_ref.shape[0]
    TGT = wfc_ref.shape[1]

    t = pl.program_id(1)      # time-block index (sequential / "arbitrary")

    @pl.when(t == 0)
    def _():
        h_ref[...] = jnp.zeros_like(h_ref)

    # --- non-recurrent input projection: one MXU matmul for the whole block ---
    #   xw[..., 0:H]   = x W_ir^T + b_ir + b_hr
    #   xw[..., H:2H]  = x W_iz^T + b_iz + b_hz
    #   xw[..., 2H:3H] = x W_in^T + b_in
    xw = (jnp.dot(x_ref[...].reshape(BB * TB, I), wi_ref[...],
                  preferred_element_type=jnp.float32)
          + bi_ref[...]).reshape(BB, TB, 3 * H)

    # --- serial recurrence: only h @ W_h per step, statically unrolled ---
    wh = wh_ref[...]                 # hoisted: loaded once, stays in vregs
    bhn = bhn_ref[...]
    h = h_ref[...]
    for s in range(TB):
        xw_s = xw[:, s, :]                                           # (BB, 3H)
        hw = jnp.dot(h, wh, preferred_element_type=jnp.float32)      # (BB, 3H)
        r = jax.nn.sigmoid(xw_s[:, :H] + hw[:, :H])
        z = jax.nn.sigmoid(xw_s[:, H:2 * H] + hw[:, H:2 * H])
        n = jnp.tanh(xw_s[:, 2 * H:] + r * (hw[:, 2 * H:] + bhn))
        h = (1.0 - z) * n + z * h
        hs_ref[:, s:s + 1, :] = h[:, None, :]
    h_ref[...] = h

    # --- FC head once per block (fc_dropout is identity in eval mode) ---
    logits = (jnp.dot(hs_ref[...].reshape(BB * TB, H), wfc_ref[...],
                      preferred_element_type=jnp.float32)
              + bfc_ref[...])
    out_ref[...] = logits.reshape(BB, TB, TGT).astype(out_ref.dtype)


# ----------------------------------------------------------------------------
# Wrapper: batch-first (B, T, I) in, (B, T, target_size) out.
# ----------------------------------------------------------------------------
def dialogue_infer_forward(x_btI, params, *, time_block=8):
    B, T, I = x_btI.shape
    H = params["w_hr"].shape[0]
    TGT = params["w_fc"].shape[0]

    # Fuse gate weights / biases (pre-transposed for plain row x col matmuls).
    wi = jnp.concatenate([params["w_ir"].T, params["w_iz"].T, params["w_in"].T], axis=1)  # (I, 3H)
    wh = jnp.concatenate([params["w_hr"].T, params["w_hz"].T, params["w_hn"].T], axis=1)  # (H, 3H)
    bi = jnp.concatenate([params["b_ir"] + params["b_hr"],
                          params["b_iz"] + params["b_hz"],
                          params["b_in"]], axis=0)[None, :]                                # (1, 3H)
    bhn = params["b_hn"][None, :]                                                          # (1, H)
    wfc = params["w_fc"].T                                                                 # (H, TGT)
    bfc = params["b_fc"][None, :]                                                          # (1, TGT)

    # Time blocking: TB must be a multiple of 8 (sublane tiling); pad T if needed.
    TB = max(8, (time_block // 8) * 8)
    T_pad = ((T + TB - 1) // TB) * TB
    x_pad = x_btI if T_pad == T else jnp.pad(x_btI, ((0, 0), (0, T_pad - T), (0, 0)))
    NT = T_pad // TB

    # Batch blocking: independent recurrences -> a "parallel" grid axis lets
    # v7x megacore split batch across its two TensorCores.  Only split when
    # each half keeps >= 8 rows (full sublanes); otherwise keep one block and
    # avoid degenerate 1-row matmuls.
    NB = 2 if (B % 2 == 0 and (B // 2) % 8 == 0) else 1
    BB = B // NB

    const = lambda shape: pl.BlockSpec(shape, lambda b, t: (0, 0))

    out = pl.pallas_call(
        _gru_block_kernel,
        out_shape=jax.ShapeDtypeStruct((B, T_pad, TGT), jnp.float32),
        grid_spec=pltpu.PrefetchScalarGridSpec(
            num_scalar_prefetch=0,
            grid=(NB, NT),
            in_specs=[
                pl.BlockSpec((BB, TB, I), lambda b, t: (b, t, 0)),  # x tile
                const((I, 3 * H)),    # fused input weights   (resident)
                const((1, 3 * H)),    # fused biases          (resident)
                const((H, 3 * H)),    # fused hidden weights  (resident)
                const((1, H)),        # b_hn                  (resident)
                const((H, TGT)),      # FC weight             (resident)
                const((1, TGT)),      # FC bias               (resident)
            ],
            out_specs=pl.BlockSpec((BB, TB, TGT), lambda b, t: (b, t, 0)),
            scratch_shapes=[
                pltpu.VMEM((BB, H), jnp.float32),      # carried hidden state
                pltpu.VMEM((BB, TB, H), jnp.float32),  # per-block hidden states
            ],
        ),
        compiler_params=pltpu.CompilerParams(
            # batch blocks are independent -> parallel (megacore); the time
            # axis carries the GRU recurrence -> arbitrary (sequential).
            dimension_semantics=("parallel", "arbitrary"),
            # TODO(synk): at production sizes (large H/I) additionally set
            # vmem_limit_bytes = weights + 2x input/output tiles + scratch,
            # and cast weight operands to bf16 for the v6e/v7x MXU.
        ),
    )(x_pad, wi, bi, wh, bhn, wfc, bfc)

    return out[:, :T, :]


# ----------------------------------------------------------------------------
# Pure-JAX reference (for correctness check)
# ----------------------------------------------------------------------------
def reference_forward(x_btI, p):
    def step(h, x_t):
        r = jax.nn.sigmoid(x_t @ p["w_ir"].T + p["b_ir"] + h @ p["w_hr"].T + p["b_hr"])
        z = jax.nn.sigmoid(x_t @ p["w_iz"].T + p["b_iz"] + h @ p["w_hz"].T + p["b_hz"])
        n = jnp.tanh(x_t @ p["w_in"].T + p["b_in"] + r * (h @ p["w_hn"].T + p["b_hn"]))
        h_new = (1.0 - z) * n + z * h
        return h_new, h_new

    B = x_btI.shape[0]
    H = p["w_hr"].shape[0]
    h0 = jnp.zeros((B, H), jnp.float32)
    _, hs = jax.lax.scan(step, h0, jnp.transpose(x_btI, (1, 0, 2)))   # (T, B, H)
    hs = jnp.transpose(hs, (1, 0, 2))                                  # (B, T, H)
    return hs @ p["w_fc"].T + p["b_fc"]


# ----------------------------------------------------------------------------
# Deterministic parameter init (fc follows the module's _init_weights; GRU
# weights use a small normal init).
# ----------------------------------------------------------------------------
def make_params(key, input_size, hidden_size, target_size):
    keys = jax.random.split(key, 8)
    std = 0.1
    return {
        "w_ir": std * jax.random.normal(keys[0], (hidden_size, input_size), jnp.float32),
        "w_iz": std * jax.random.normal(keys[1], (hidden_size, input_size), jnp.float32),
        "w_in": std * jax.random.normal(keys[2], (hidden_size, input_size), jnp.float32),
        "w_hr": std * jax.random.normal(keys[3], (hidden_size, hidden_size), jnp.float32),
        "w_hz": std * jax.random.normal(keys[4], (hidden_size, hidden_size), jnp.float32),
        "w_hn": std * jax.random.normal(keys[5], (hidden_size, hidden_size), jnp.float32),
        "b_ir": jnp.zeros((hidden_size,), jnp.float32),
        "b_iz": jnp.zeros((hidden_size,), jnp.float32),
        "b_in": jnp.zeros((hidden_size,), jnp.float32),
        "b_hr": jnp.zeros((hidden_size,), jnp.float32),
        "b_hz": jnp.zeros((hidden_size,), jnp.float32),
        "b_hn": jnp.zeros((hidden_size,), jnp.float32),
        # fc: normal(0, 0.1), bias zero (as in _init_weights)
        "w_fc": std * jax.random.normal(keys[6], (target_size, hidden_size), jnp.float32),
        "b_fc": jnp.zeros((target_size,), jnp.float32),
    }


if __name__ == "__main__":
    # cfg: input_size=32, hidden_size=32, target_size=4 ; batch=2, seq=16
    B, T, I, H, TGT = 2, 16, 32, 32, 4

    key = jax.random.PRNGKey(0)
    k_x, k_p = jax.random.split(key)
    x = jax.random.normal(k_x, (B, T, I), jnp.float32)
    params = make_params(k_p, I, H, TGT)

    out = jax.block_until_ready(dialogue_infer_forward(x, params, time_block=8))

    ref = reference_forward(x, params)
    np.testing.assert_allclose(np.asarray(out), np.asarray(ref), rtol=1e-3, atol=1e-3)

    assert out.shape == (B, T, TGT)
    print("KERNEL_OK")
</pallas_src>

<mosaic_0001>
module attributes {stable_mosaic.version = 11 : i64} {
  func.func @_gru_block_kernel(%arg0: i32, %arg1: i32, %arg2: memref<2x8x32xf32, #tpu.memory_space<vmem>>, %arg3: memref<32x96xf32, #tpu.memory_space<vmem>>, %arg4: memref<1x96xf32, #tpu.memory_space<vmem>>, %arg5: memref<32x96xf32, #tpu.memory_space<vmem>>, %arg6: memref<1x32xf32, #tpu.memory_space<vmem>>, %arg7: memref<32x4xf32, #tpu.memory_space<vmem>>, %arg8: memref<1x4xf32, #tpu.memory_space<vmem>>, %arg9: memref<2x8x4xf32, #tpu.memory_space<vmem>>, %arg10: memref<2x32xf32, #tpu.memory_space<vmem>>, %arg11: memref<2x8x32xf32, #tpu.memory_space<vmem>>) attributes {dimension_semantics = [#tpu.dimension_semantics<parallel>, #tpu.dimension_semantics<arbitrary>], iteration_bounds = array<i64: 1, 2>, scalar_prefetch = 0 : i64, scratch_operands = 2 : i64, tpu.core_type = #tpu.core_type<tc>, window_params = [{transform_indices = @transform_0, window_bounds = array<i64: 2, 8, 32>}, {pipeline_mode = #tpu.pipeline_mode<synchronous>, transform_indices = @transform_1, window_bounds = array<i64: 32, 96>}, {pipeline_mode = #tpu.pipeline_mode<synchronous>, transform_indices = @transform_2, window_bounds = array<i64: 1, 96>}, {pipeline_mode = #tpu.pipeline_mode<synchronous>, transform_indices = @transform_3, window_bounds = array<i64: 32, 96>}, {pipeline_mode = #tpu.pipeline_mode<synchronous>, transform_indices = @transform_4, window_bounds = array<i64: 1, 32>}, {pipeline_mode = #tpu.pipeline_mode<synchronous>, transform_indices = @transform_5, window_bounds = array<i64: 32, 4>}, {pipeline_mode = #tpu.pipeline_mode<synchronous>, transform_indices = @transform_6, window_bounds = array<i64: 1, 4>}, {transform_indices = @transform_7, window_bounds = array<i64: 2, 8, 4>}]} {
    %c0_i32 = arith.constant 0 : i32
    %0 = arith.cmpi eq, %arg1, %c0_i32 : i32
    %1 = arith.extui %0 : i1 to i32
    %c0_i32_0 = arith.constant 0 : i32
    %2 = arith.cmpi ne, %1, %c0_i32_0 : i32
    scf.if %2 {
      %cst_75 = arith.constant 0.000000e+00 : f32
      %288 = vector.broadcast %cst_75 : f32 to vector<2x32xf32>
      %c0_76 = arith.constant 0 : index
      %c0_77 = arith.constant 0 : index
      %289 = vector.load %arg10[%c0_76, %c0_77] : memref<2x32xf32, #tpu.memory_space<vmem>>, vector<2x32xf32>
      tpu.vector_store %arg10[%c0_76, %c0_77], %288 {strides = array<i32>} : memref<2x32xf32, #tpu.memory_space<vmem>>, vector<2x32xf32>,
    } else {
    }
    %c0 = arith.constant 0 : index
    %c0_1 = arith.constant 0 : index
    %c0_2 = arith.constant 0 : index
    %3 = vector.load %arg2[%c0, %c0_1, %c0_2] : memref<2x8x32xf32, #tpu.memory_space<vmem>>, vector<2x8x32xf32>
    %4 = vector.shape_cast %3 : vector<2x8x32xf32> to vector<16x32xf32>
    %c0_3 = arith.constant 0 : index
    %c0_4 = arith.constant 0 : index
    %5 = vector.load %arg3[%c0_3, %c0_4] : memref<32x96xf32, #tpu.memory_space<vmem>>, vector<32x96xf32>
    %cst = arith.constant dense<0.000000e+00> : vector<16x96xf32>
    %6 = tpu.matmul %4, %5, %cst {dimension_numbers = #tpu.dot_dimension_numbers<[1], [0], [0], [1], [0, 0, 1, 1], [], []>} : vector<16x32xf32>, vector<32x96xf32>, vector<16x96xf32> -> vector<16x96xf32>
    %c0_5 = arith.constant 0 : index
    %c0_6 = arith.constant 0 : index
    %7 = vector.load %arg4[%c0_5, %c0_6] : memref<1x96xf32, #tpu.memory_space<vmem>>, vector<1x96xf32>
    %8 = vector.broadcast %7 : vector<1x96xf32> to vector<16x96xf32>
    %9 = arith.addf %6, %8 : vector<16x96xf32>
    %10 = vector.shape_cast %9 : vector<16x96xf32> to vector<2x8x96xf32>
    %c0_7 = arith.constant 0 : index
    %c0_8 = arith.constant 0 : index
    %11 = vector.load %arg5[%c0_7, %c0_8] : memref<32x96xf32, #tpu.memory_space<vmem>>, vector<32x96xf32>
    %c0_9 = arith.constant 0 : index
    %c0_10 = arith.constant 0 : index
    %12 = vector.load %arg6[%c0_9, %c0_10] : memref<1x32xf32, #tpu.memory_space<vmem>>, vector<1x32xf32>
    %c0_11 = arith.constant 0 : index
    %c0_12 = arith.constant 0 : index
    %13 = vector.load %arg10[%c0_11, %c0_12] : memref<2x32xf32, #tpu.memory_space<vmem>>, vector<2x32xf32>
    %14 = vector.extract_strided_slice %10 {offsets = [0, 0, 0], sizes = [2, 1, 96], strides = [1, 1, 1]} : vector<2x8x96xf32> to vector<2x1x96xf32>
    %15 = vector.shape_cast %14 : vector<2x1x96xf32> to vector<2x96xf32>
    %cst_13 = arith.constant dense<0.000000e+00> : vector<2x96xf32>
    %16 = tpu.matmul %13, %11, %cst_13 {dimension_numbers = #tpu.dot_dimension_numbers<[1], [0], [0], [1], [0, 0, 1, 1], [], []>} : vector<2x32xf32>, vector<32x96xf32>, vector<2x96xf32> -> vector<2x96xf32>
    %17 = vector.extract_strided_slice %15 {offsets = [0, 0], sizes = [2, 32], strides = [1, 1]} : vector<2x96xf32> to vector<2x32xf32>
    %18 = vector.extract_strided_slice %16 {offsets = [0, 0], sizes = [2, 32], strides = [1, 1]} : vector<2x96xf32> to vector<2x32xf32>
    %19 = arith.addf %17, %18 : vector<2x32xf32>
    %20 = arith.negf %19 : vector<2x32xf32>
    %21 = math.exp %20 : vector<2x32xf32>
    %cst_14 = arith.constant 1.000000e+00 : f32
    %22 = vector.broadcast %cst_14 : f32 to vector<2x32xf32>
    %23 = arith.addf %22, %21 : vector<2x32xf32>
    %24 = arith.divf %22, %23 : vector<2x32xf32>
    %25 = vector.extract_strided_slice %15 {offsets = [0, 32], sizes = [2, 32], strides = [1, 1]} : vector<2x96xf32> to vector<2x32xf32>
    %26 = vector.extract_strided_slice %16 {offsets = [0, 32], sizes = [2, 32], strides = [1, 1]} : vector<2x96xf32> to vector<2x32xf32>
    %27 = arith.addf %25, %26 : vector<2x32xf32>
    %28 = arith.negf %27 : vector<2x32xf32>
    %29 = math.exp %28 : vector<2x32xf32>
    %cst_15 = arith.constant 1.000000e+00 : f32
    %30 = vector.broadcast %cst_15 : f32 to vector<2x32xf32>
    %31 = arith.addf %30, %29 : vector<2x32xf32>
    %32 = arith.divf %30, %31 : vector<2x32xf32>
    %33 = vector.extract_strided_slice %15 {offsets = [0, 64], sizes = [2, 32], strides = [1, 1]} : vector<2x96xf32> to vector<2x32xf32>
    %34 = vector.extract_strided_slice %16 {offsets = [0, 64], sizes = [2, 32], strides = [1, 1]} : vector<2x96xf32> to vector<2x32xf32>
    %35 = vector.broadcast %12 : vector<1x32xf32> to vector<2x32xf32>
    %36 = arith.addf %34, %35 : vector<2x32xf32>
    %37 = arith.mulf %24, %36 : vector<2x32xf32>
    %38 = arith.addf %33, %37 : vector<2x32xf32>
    %39 = math.tanh %38 : vector<2x32xf32>
    %cst_16 = arith.constant 1.000000e+00 : f32
    %40 = vector.broadcast %cst_16 : f32 to vector<2x32xf32>
    %41 = arith.subf %40, %32 : vector<2x32xf32>
    %42 = arith.mulf %41, %39 : vector<2x32xf32>
    %43 = arith.mulf %32, %13 : vector<2x32xf32>
    %44 = arith.addf %42, %43 : vector<2x32xf32>
    %45 = vector.shape_cast %44 : vector<2x32xf32> to vector<2x1x32xf32>
    %c0_17 = arith.constant 0 : index
    %c0_18 = arith.constant 0 : index
    %c0_19 = arith.constant 0 : index
    %46 = vector.load %arg11[%c0_17, %c0_18, %c0_19] : memref<2x8x32xf32, #tpu.memory_space<vmem>>, vector<2x1x32xf32>
    tpu.vector_store %arg11[%c0_17, %c0_18, %c0_19], %45 {strides = array<i32>} : memref<2x8x32xf32, #tpu.memory_space<vmem>>, vector<2x1x32xf32>,
    %47 = vector.extract_strided_slice %10 {offsets = [0, 1, 0], sizes = [2, 1, 96], strides = [1, 1, 1]} : vector<2x8x96xf32> to vector<2x1x96xf32>
    %48 = vector.shape_cast %47 : vector<2x1x96xf32> to vector<2x96xf32>
    %cst_20 = arith.constant dense<0.000000e+00> : vector<2x96xf32>
    %49 = tpu.matmul %44, %11, %cst_20 {dimension_numbers = #tpu.dot_dimension_numbers<[1], [0], [0], [1], [0, 0, 1, 1], [], []>} : vector<2x32xf32>, vector<32x96xf32>, vector<2x96xf32> -> vector<2x96xf32>
    %50 = vector.extract_strided_slice %48 {offsets = [0, 0], sizes = [2, 32], strides = [1, 1]} : vector<2x96xf32> to vector<2x32xf32>
    %51 = vector.extract_strided_slice %49 {offsets = [0, 0], sizes = [2, 32], strides = [1, 1]} : vector<2x96xf32> to vector<2x32xf32>
    %52 = arith.addf %50, %51 : vector<2x32xf32>
    %53 = arith.negf %52 : vector<2x32xf32>
    %54 = math.exp %53 : vector<2x32xf32>
    %cst_21 = arith.constant 1.000000e+00 : f32
    %55 = vector.broadcast %cst_21 : f32 to vector<2x32xf32>
    %56 = arith.addf %55, %54 : vector<2x32xf32>
    %57 = arith.divf %55, %56 : vector<2x32xf32>
    %58 = vector.extract_strided_slice %48 {offsets = [0, 32], sizes = [2, 32], strides = [1, 1]} : vector<2x96xf32> to vector<2x32xf32>
    %59 = vector.extract_strided_slice %49 {offsets = [0, 32], sizes = [2, 32], strides = [1, 1]} : vector<2x96xf32> to vector<2x32xf32>
    %60 = arith.addf %58, %59 : vector<2x32xf32>
    %61 = arith.negf %60 : vector<2x32xf32>
    %62 = math.exp %61 : vector<2x32xf32>
    %cst_22 = arith.constant 1.000000e+00 : f32
    %63 = vector.broadcast %cst_22 : f32 to vector<2x32xf32>
    %64 = arith.addf %63, %62 : vector<2x32xf32>
    %65 = arith.divf %63, %64 : vector<2x32xf32>
    %66 = vector.extract_strided_slice %48 {offsets = [0, 64], sizes = [2, 32], strides = [1, 1]} : vector<2x96xf32> to vector<2x32xf32>
    %67 = vector.extract_strided_slice %49 {offsets = [0, 64], sizes = [2, 32], strides = [1, 1]} : vector<2x96xf32> to vector<2x32xf32>
    %68 = vector.broadcast %12 : vector<1x32xf32> to vector<2x32xf32>
    %69 = arith.addf %67, %68 : vector<2x32xf32>
    %70 = arith.mulf %57, %69 : vector<2x32xf32>
    %71 = arith.addf %66, %70 : vector<2x32xf32>
    %72 = math.tanh %71 : vector<2x32xf32>
    %cst_23 = arith.constant 1.000000e+00 : f32
    %73 = vector.broadcast %cst_23 : f32 to vector<2x32xf32>
    %74 = arith.subf %73, %65 : vector<2x32xf32>
    %75 = arith.mulf %74, %72 : vector<2x32xf32>
    %76 = arith.mulf %65, %44 : vector<2x32xf32>
    %77 = arith.addf %75, %76 : vector<2x32xf32>
    %78 = vector.shape_cast %77 : vector<2x32xf32> to vector<2x1x32xf32>
    %c0_24 = arith.constant 0 : index
    %c1 = arith.constant 1 : index
    %c0_25 = arith.constant 0 : index
    %79 = vector.load %arg11[%c0_24, %c1, %c0_25] : memref<2x8x32xf32, #tpu.memory_space<vmem>>, vector<2x1x32xf32>
    tpu.vector_store %arg11[%c0_24, %c1, %c0_25], %78 {strides = array<i32>} : memref<2x8x32xf32, #tpu.memory_space<vmem>>, vector<2x1x32xf32>,
    %80 = vector.extract_strided_slice %10 {offsets = [0, 2, 0], sizes = [2, 1, 96], strides = [1, 1, 1]} : vector<2x8x96xf32> to vector<2x1x96xf32>
    %81 = vector.shape_cast %80 : vector<2x1x96xf32> to vector<2x96xf32>
    %cst_26 = arith.constant dense<0.000000e+00> : vector<2x96xf32>
    %82 = tpu.matmul %77, %11, %cst_26 {dimension_numbers = #tpu.dot_dimension_numbers<[1], [0], [0], [1], [0, 0, 1, 1], [], []>} : vector<2x32xf32>, vector<32x96xf32>, vector<2x96xf32> -> vector<2x96xf32>
    %83 = vector.extract_strided_slice %81 {offsets = [0, 0], sizes = [2, 32], strides = [1, 1]} : vector<2x96xf32> to vector<2x32xf32>
    %84 = vector.extract_strided_slice %82 {offsets = [0, 0], sizes = [2, 32], strides = [1, 1]} : vector<2x96xf32> to vector<2x32xf32>
    %85 = arith.addf %83, %84 : vector<2x32xf32>
    %86 = arith.negf %85 : vector<2x32xf32>
    %87 = math.exp %86 : vector<2x32xf32>
    %cst_27 = arith.constant 1.000000e+00 : f32
    %88 = vector.broadcast %cst_27 : f32 to vector<2x32xf32>
    %89 = arith.addf %88, %87 : vector<2x32xf32>
    %90 = arith.divf %88, %89 : vector<2x32xf32>
    %91 = vector.extract_strided_slice %81 {offsets = [0, 32], sizes = [2, 32], strides = [1, 1]} : vector<2x96xf32> to vector<2x32xf32>
    %92 = vector.extract_strided_slice %82 {offsets = [0, 32], sizes = [2, 32], strides = [1, 1]} : vector<2x96xf32> to vector<2x32xf32>
    %93 = arith.addf %91, %92 : vector<2x32xf32>
    %94 = arith.negf %93 : vector<2x32xf32>
    %95 = math.exp %94 : vector<2x32xf32>
    %cst_28 = arith.constant 1.000000e+00 : f32
    %96 = vector.broadcast %cst_28 : f32 to vector<2x32xf32>
    %97 = arith.addf %96, %95 : vector<2x32xf32>
    %98 = arith.divf %96, %97 : vector<2x32xf32>
    %99 = vector.extract_strided_slice %81 {offsets = [0, 64], sizes = [2, 32], strides = [1, 1]} : vector<2x96xf32> to vector<2x32xf32>
    %100 = vector.extract_strided_slice %82 {offsets = [0, 64], sizes = [2, 32], strides = [1, 1]} : vector<2x96xf32> to vector<2x32xf32>
    %101 = vector.broadcast %12 : vector<1x32xf32> to vector<2x32xf32>
    %102 = arith.addf %100, %101 : vector<2x32xf32>
    %103 = arith.mulf %90, %102 : vector<2x32xf32>
    %104 = arith.addf %99, %103 : vector<2x32xf32>
    %105 = math.tanh %104 : vector<2x32xf32>
    %cst_29 = arith.constant 1.000000e+00 : f32
    %106 = vector.broadcast %cst_29 : f32 to vector<2x32xf32>
    %107 = arith.subf %106, %98 : vector<2x32xf32>
    %108 = arith.mulf %107, %105 : vector<2x32xf32>
    %109 = arith.mulf %98, %77 : vector<2x32xf32>
    %110 = arith.addf %108, %109 : vector<2x32xf32>
    %111 = vector.shape_cast %110 : vector<2x32xf32> to vector<2x1x32xf32>
    %c0_30 = arith.constant 0 : index
    %c2 = arith.constant 2 : index
    %c0_31 = arith.constant 0 : index
    %112 = vector.load %arg11[%c0_30, %c2, %c0_31] : memref<2x8x32xf32, #tpu.memory_space<vmem>>, vector<2x1x32xf32>
    tpu.vector_store %arg11[%c0_30, %c2, %c0_31], %111 {strides = array<i32>} : memref<2x8x32xf32, #tpu.memory_space<vmem>>, vector<2x1x32xf32>,
    %113 = vector.extract_strided_slice %10 {offsets = [0, 3, 0], sizes = [2, 1, 96], strides = [1, 1, 1]} : vector<2x8x96xf32> to vector<2x1x96xf32>
    %114 = vector.shape_cast %113 : vector<2x1x96xf32> to vector<2x96xf32>
    %cst_32 = arith.constant dense<0.000000e+00> : vector<2x96xf32>
    %115 = tpu.matmul %110, %11, %cst_32 {dimension_numbers = #tpu.dot_dimension_numbers<[1], [0], [0], [1], [0, 0, 1, 1], [], []>} : vector<2x32xf32>, vector<32x96xf32>, vector<2x96xf32> -> vector<2x96xf32>
    %116 = vector.extract_strided_slice %114 {offsets = [0, 0], sizes = [2, 32], strides = [1, 1]} : vector<2x96xf32> to vector<2x32xf32>
    %117 = vector.extract_strided_slice %115 {offsets = [0, 0], sizes = [2, 32], strides = [1, 1]} : vector<2x96xf32> to vector<2x32xf32>
    %118 = arith.addf %116, %117 : vector<2x32xf32>
    %119 = arith.negf %118 : vector<2x32xf32>
    %120 = math.exp %119 : vector<2x32xf32>
    %cst_33 = arith.constant 1.000000e+00 : f32
    %121 = vector.broadcast %cst_33 : f32 to vector<2x32xf32>
    %122 = arith.addf %121, %120 : vector<2x32xf32>
    %123 = arith.divf %121, %122 : vector<2x32xf32>
    %124 = vector.extract_strided_slice %114 {offsets = [0, 32], sizes = [2, 32], strides = [1, 1]} : vector<2x96xf32> to vector<2x32xf32>
    %125 = vector.extract_strided_slice %115 {offsets = [0, 32], sizes = [2, 32], strides = [1, 1]} : vector<2x96xf32> to vector<2x32xf32>
    %126 = arith.addf %124, %125 : vector<2x32xf32>
    %127 = arith.negf %126 : vector<2x32xf32>
    %128 = math.exp %127 : vector<2x32xf32>
    %cst_34 = arith.constant 1.000000e+00 : f32
    %129 = vector.broadcast %cst_34 : f32 to vector<2x32xf32>
    %130 = arith.addf %129, %128 : vector<2x32xf32>
    %131 = arith.divf %129, %130 : vector<2x32xf32>
    %132 = vector.extract_strided_slice %114 {offsets = [0, 64], sizes = [2, 32], strides = [1, 1]} : vector<2x96xf32> to vector<2x32xf32>
    %133 = vector.extract_strided_slice %115 {offsets = [0, 64], sizes = [2, 32], strides = [1, 1]} : vector<2x96xf32> to vector<2x32xf32>
    %134 = vector.broadcast %12 : vector<1x32xf32> to vector<2x32xf32>
    %135 = arith.addf %133, %134 : vector<2x32xf32>
    %136 = arith.mulf %123, %135 : vector<2x32xf32>
    %137 = arith.addf %132, %136 : vector<2x32xf32>
    %138 = math.tanh %137 : vector<2x32xf32>
    %cst_35 = arith.constant 1.000000e+00 : f32
    %139 = vector.broadcast %cst_35 : f32 to vector<2x32xf32>
    %140 = arith.subf %139, %131 : vector<2x32xf32>
    %141 = arith.mulf %140, %138 : vector<2x32xf32>
    %142 = arith.mulf %131, %110 : vector<2x32xf32>
    %143 = arith.addf %141, %142 : vector<2x32xf32>
    %144 = vector.shape_cast %143 : vector<2x32xf32> to vector<2x1x32xf32>
    %c0_36 = arith.constant 0 : index
    %c3 = arith.constant 3 : index
    %c0_37 = arith.constant 0 : index
    %145 = vector.load %arg11[%c0_36, %c3, %c0_37] : memref<2x8x32xf32, #tpu.memory_space<vmem>>, vector<2x1x32xf32>
    tpu.vector_store %arg11[%c0_36, %c3, %c0_37], %144 {strides = array<i32>} : memref<2x8x32xf32, #tpu.memory_space<vmem>>, vector<2x1x32xf32>,
    %146 = vector.extract_strided_slice %10 {offsets = [0, 4, 0], sizes = [2, 1, 96], strides = [1, 1, 1]} : vector<2x8x96xf32> to vector<2x1x96xf32>
    %147 = vector.shape_cast %146 : vector<2x1x96xf32> to vector<2x96xf32>
    %cst_38 = arith.constant dense<0.000000e+00> : vector<2x96xf32>
    %148 = tpu.matmul %143, %11, %cst_38 {dimension_numbers = #tpu.dot_dimension_numbers<[1], [0], [0], [1], [0, 0, 1, 1], [], []>} : vector<2x32xf32>, vector<32x96xf32>, vector<2x96xf32> -> vector<2x96xf32>
    %149 = vector.extract_strided_slice %147 {offsets = [0, 0], sizes = [2, 32], strides = [1, 1]} : vector<2x96xf32> to vector<2x32xf32>
    %150 = vector.extract_strided_slice %148 {offsets = [0, 0], sizes = [2, 32], strides = [1, 1]} : vector<2x96xf32> to vector<2x32xf32>
    %151 = arith.addf %149, %150 : vector<2x32xf32>
    %152 = arith.negf %151 : vector<2x32xf32>
    %153 = math.exp %152 : vector<2x32xf32>
    %cst_39 = arith.constant 1.000000e+00 : f32
    %154 = vector.broadcast %cst_39 : f32 to vector<2x32xf32>
    %155 = arith.addf %154, %153 : vector<2x32xf32>
    %156 = arith.divf %154, %155 : vector<2x32xf32>
    %157 = vector.extract_strided_slice %147 {offsets = [0, 32], sizes = [2, 32], strides = [1, 1]} : vector<2x96xf32> to vector<2x32xf32>
    %158 = vector.extract_strided_slice %148 {offsets = [0, 32], sizes = [2, 32], strides = [1, 1]} : vector<2x96xf32> to vector<2x32xf32>
    %159 = arith.addf %157, %158 : vector<2x32xf32>
    %160 = arith.negf %159 : vector<2x32xf32>
    %161 = math.exp %160 : vector<2x32xf32>
    %cst_40 = arith.constant 1.000000e+00 : f32
    %162 = vector.broadcast %cst_40 : f32 to vector<2x32xf32>
    %163 = arith.addf %162, %161 : vector<2x32xf32>
    %164 = arith.divf %162, %163 : vector<2x32xf32>
    %165 = vector.extract_strided_slice %147 {offsets = [0, 64], sizes = [2, 32], strides = [1, 1]} : vector<2x96xf32> to vector<2x32xf32>
    %166 = vector.extract_strided_slice %148 {offsets = [0, 64], sizes = [2, 32], strides = [1, 1]} : vector<2x96xf32> to vector<2x32xf32>
    %167 = vector.broadcast %12 : vector<1x32xf32> to vector<2x32xf32>
    %168 = arith.addf %166, %167 : vector<2x32xf32>
    %169 = arith.mulf %156, %168 : vector<2x32xf32>
    %170 = arith.addf %165, %169 : vector<2x32xf32>
    %171 = math.tanh %170 : vector<2x32xf32>
    %cst_41 = arith.constant 1.000000e+00 : f32
    %172 = vector.broadcast %cst_41 : f32 to vector<2x32xf32>
    %173 = arith.subf %172, %164 : vector<2x32xf32>
    %174 = arith.mulf %173, %171 : vector<2x32xf32>
    %175 = arith.mulf %164, %143 : vector<2x32xf32>
    %176 = arith.addf %174, %175 : vector<2x32xf32>
    %177 = vector.shape_cast %176 : vector<2x32xf32> to vector<2x1x32xf32>
    %c0_42 = arith.constant 0 : index
    %c4 = arith.constant 4 : index
    %c0_43 = arith.constant 0 : index
    %178 = vector.load %arg11[%c0_42, %c4, %c0_43] : memref<2x8x32xf32, #tpu.memory_space<vmem>>, vector<2x1x32xf32>
    tpu.vector_store %arg11[%c0_42, %c4, %c0_43], %177 {strides = array<i32>} : memref<2x8x32xf32, #tpu.memory_space<vmem>>, vector<2x1x32xf32>,
    %179 = vector.extract_strided_slice %10 {offsets = [0, 5, 0], sizes = [2, 1, 96], strides = [1, 1, 1]} : vector<2x8x96xf32> to vector<2x1x96xf32>
    %180 = vector.shape_cast %179 : vector<2x1x96xf32> to vector<2x96xf32>
    %cst_44 = arith.constant dense<0.000000e+00> : vector<2x96xf32>
    %181 = tpu.matmul %176, %11, %cst_44 {dimension_numbers = #tpu.dot_dimension_numbers<[1], [0], [0], [1], [0, 0, 1, 1], [], []>} : vector<2x32xf32>, vector<32x96xf32>, vector<2x96xf32> -> vector<2x96xf32>
    %182 = vector.extract_strided_slice %180 {offsets = [0, 0], sizes = [2, 32], strides = [1, 1]} : vector<2x96xf32> to vector<2x32xf32>
    %183 = vector.extract_strided_slice %181 {offsets = [0, 0], sizes = [2, 32], strides = [1, 1]} : vector<2x96xf32> to vector<2x32xf32>
    %184 = arith.addf %182, %183 : vector<2x32xf32>
    %185 = arith.negf %184 : vector<2x32xf32>
    %186 = math.exp %185 : vector<2x32xf32>
    %cst_45 = arith.constant 1.000000e+00 : f32
    %187 = vector.broadcast %cst_45 : f32 to vector<2x32xf32>
    %188 = arith.addf %187, %186 : vector<2x32xf32>
    %189 = arith.divf %187, %188 : vector<2x32xf32>
    %190 = vector.extract_strided_slice %180 {offsets = [0, 32], sizes = [2, 32], strides = [1, 1]} : vector<2x96xf32> to vector<2x32xf32>
    %191 = vector.extract_strided_slice %181 {offsets = [0, 32], sizes = [2, 32], strides = [1, 1]} : vector<2x96xf32> to vector<2x32xf32>
    %192 = arith.addf %190, %191 : vector<2x32xf32>
    %193 = arith.negf %192 : vector<2x32xf32>
    %194 = math.exp %193 : vector<2x32xf32>
    %cst_46 = arith.constant 1.000000e+00 : f32
    %195 = vector.broadcast %cst_46 : f32 to vector<2x32xf32>
    %196 = arith.addf %195, %194 : vector<2x32xf32>
    %197 = arith.divf %195, %196 : vector<2x32xf32>
    %198 = vector.extract_strided_slice %180 {offsets = [0, 64], sizes = [2, 32], strides = [1, 1]} : vector<2x96xf32> to vector<2x32xf32>
    %199 = vector.extract_strided_slice %181 {offsets = [0, 64], sizes = [2, 32], strides = [1, 1]} : vector<2x96xf32> to vector<2x32xf32>
    %200 = vector.broadcast %12 : vector<1x32xf32> to vector<2x32xf32>
    %201 = arith.addf %199, %200 : vector<2x32xf32>
    %202 = arith.mulf %189, %201 : vector<2x32xf32>
    %203 = arith.addf %198, %202 : vector<2x32xf32>
    %204 = math.tanh %203 : vector<2x32xf32>
    %cst_47 = arith.constant 1.000000e+00 : f32
    %205 = vector.broadcast %cst_47 : f32 to vector<2x32xf32>
    %206 = arith.subf %205, %197 : vector<2x32xf32>
    %207 = arith.mulf %206, %204 : vector<2x32xf32>
    %208 = arith.mulf %197, %176 : vector<2x32xf32>
    %209 = arith.addf %207, %208 : vector<2x32xf32>
    %210 = vector.shape_cast %209 : vector<2x32xf32> to vector<2x1x32xf32>
    %c0_48 = arith.constant 0 : index
    %c5 = arith.constant 5 : index
    %c0_49 = arith.constant 0 : index
    %211 = vector.load %arg11[%c0_48, %c5, %c0_49] : memref<2x8x32xf32, #tpu.memory_space<vmem>>, vector<2x1x32xf32>
    tpu.vector_store %arg11[%c0_48, %c5, %c0_49], %210 {strides = array<i32>} : memref<2x8x32xf32, #tpu.memory_space<vmem>>, vector<2x1x32xf32>,
    %212 = vector.extract_strided_slice %10 {offsets = [0, 6, 0], sizes = [2, 1, 96], strides = [1, 1, 1]} : vector<2x8x96xf32> to vector<2x1x96xf32>
    %213 = vector.shape_cast %212 : vector<2x1x96xf32> to vector<2x96xf32>
    %cst_50 = arith.constant dense<0.000000e+00> : vector<2x96xf32>
    %214 = tpu.matmul %209, %11, %cst_50 {dimension_numbers = #tpu.dot_dimension_numbers<[1], [0], [0], [1], [0, 0, 1, 1], [], []>} : vector<2x32xf32>, vector<32x96xf32>, vector<2x96xf32> -> vector<2x96xf32>
    %215 = vector.extract_strided_slice %213 {offsets = [0, 0], sizes = [2, 32], strides = [1, 1]} : vector<2x96xf32> to vector<2x32xf32>
    %216 = vector.extract_strided_slice %214 {offsets = [0, 0], sizes = [2, 32], strides = [1, 1]} : vector<2x96xf32> to vector<2x32xf32>
    %217 = arith.addf %215, %216 : vector<2x32xf32>
    %218 = arith.negf %217 : vector<2x32xf32>
    %219 = math.exp %218 : vector<2x32xf32>
    %cst_51 = arith.constant 1.000000e+00 : f32
    %220 = vector.broadcast %cst_51 : f32 to vector<2x32xf32>
    %221 = arith.addf %220, %219 : vector<2x32xf32>
    %222 = arith.divf %220, %221 : vector<2x32xf32>
    %223 = vector.extract_strided_slice %213 {offsets = [0, 32], sizes = [2, 32], strides = [1, 1]} : vector<2x96xf32> to vector<2x32xf32>
    %224 = vector.extract_strided_slice %214 {offsets = [0, 32], sizes = [2, 32], strides = [1, 1]} : vector<2x96xf32> to vector<2x32xf32>
    %225 = arith.addf %223, %224 : vector<2x32xf32>
    %226 = arith.negf %225 : vector<2x32xf32>
    %227 = math.exp %226 : vector<2x32xf32>
    %cst_52 = arith.constant 1.000000e+00 : f32
    %228 = vector.broadcast %cst_52 : f32 to vector<2x32xf32>
    %229 = arith.addf %228, %227 : vector<2x32xf32>
    %230 = arith.divf %228, %229 : vector<2x32xf32>
    %231 = vector.extract_strided_slice %213 {offsets = [0, 64], sizes = [2, 32], strides = [1, 1]} : vector<2x96xf32> to vector<2x32xf32>
    %232 = vector.extract_strided_slice %214 {offsets = [0, 64], sizes = [2, 32], strides = [1, 1]} : vector<2x96xf32> to vector<2x32xf32>
    %233 = vector.broadcast %12 : vector<1x32xf32> to vector<2x32xf32>
    %234 = arith.addf %232, %233 : vector<2x32xf32>
    %235 = arith.mulf %222, %234 : vector<2x32xf32>
    %236 = arith.addf %231, %235 : vector<2x32xf32>
    %237 = math.tanh %236 : vector<2x32xf32>
    %cst_53 = arith.constant 1.000000e+00 : f32
    %238 = vector.broadcast %cst_53 : f32 to vector<2x32xf32>
    %239 = arith.subf %238, %230 : vector<2x32xf32>
    %240 = arith.mulf %239, %237 : vector<2x32xf32>
    %241 = arith.mulf %230, %209 : vector<2x32xf32>
    %242 = arith.addf %240, %241 : vector<2x32xf32>
    %243 = vector.shape_cast %242 : vector<2x32xf32> to vector<2x1x32xf32>
    %c0_54 = arith.constant 0 : index
    %c6 = arith.constant 6 : index
    %c0_55 = arith.constant 0 : index
    %244 = vector.load %arg11[%c0_54, %c6, %c0_55] : memref<2x8x32xf32, #tpu.memory_space<vmem>>, vector<2x1x32xf32>
    tpu.vector_store %arg11[%c0_54, %c6, %c0_55], %243 {strides = array<i32>} : memref<2x8x32xf32, #tpu.memory_space<vmem>>, vector<2x1x32xf32>,
    %245 = vector.extract_strided_slice %10 {offsets = [0, 7, 0], sizes = [2, 1, 96], strides = [1, 1, 1]} : vector<2x8x96xf32> to vector<2x1x96xf32>
    %246 = vector.shape_cast %245 : vector<2x1x96xf32> to vector<2x96xf32>
    %cst_56 = arith.constant dense<0.000000e+00> : vector<2x96xf32>
    %247 = tpu.matmul %242, %11, %cst_56 {dimension_numbers = #tpu.dot_dimension_numbers<[1], [0], [0], [1], [0, 0, 1, 1], [], []>} : vector<2x32xf32>, vector<32x96xf32>, vector<2x96xf32> -> vector<2x96xf32>
    %248 = vector.extract_strided_slice %246 {offsets = [0, 0], sizes = [2, 32], strides = [1, 1]} : vector<2x96xf32> to vector<2x32xf32>
    %249 = vector.extract_strided_slice %247 {offsets = [0, 0], sizes = [2, 32], strides = [1, 1]} : vector<2x96xf32> to vector<2x32xf32>
    %250 = arith.addf %248, %249 : vector<2x32xf32>
    %251 = arith.negf %250 : vector<2x32xf32>
    %252 = math.exp %251 : vector<2x32xf32>
    %cst_57 = arith.constant 1.000000e+00 : f32
    %253 = vector.broadcast %cst_57 : f32 to vector<2x32xf32>
    %254 = arith.addf %253, %252 : vector<2x32xf32>
    %255 = arith.divf %253, %254 : vector<2x32xf32>
    %256 = vector.extract_strided_slice %246 {offsets = [0, 32], sizes = [2, 32], strides = [1, 1]} : vector<2x96xf32> to vector<2x32xf32>
    %257 = vector.extract_strided_slice %247 {offsets = [0, 32], sizes = [2, 32], strides = [1, 1]} : vector<2x96xf32> to vector<2x32xf32>
    %258 = arith.addf %256, %257 : vector<2x32xf32>
    %259 = arith.negf %258 : vector<2x32xf32>
    %260 = math.exp %259 : vector<2x32xf32>
    %cst_58 = arith.constant 1.000000e+00 : f32
    %261 = vector.broadcast %cst_58 : f32 to vector<2x32xf32>
    %262 = arith.addf %261, %260 : vector<2x32xf32>
    %263 = arith.divf %261, %262 : vector<2x32xf32>
    %264 = vector.extract_strided_slice %246 {offsets = [0, 64], sizes = [2, 32], strides = [1, 1]} : vector<2x96xf32> to vector<2x32xf32>
    %265 = vector.extract_strided_slice %247 {offsets = [0, 64], sizes = [2, 32], strides = [1, 1]} : vector<2x96xf32> to vector<2x32xf32>
    %266 = vector.broadcast %12 : vector<1x32xf32> to vector<2x32xf32>
    %267 = arith.addf %265, %266 : vector<2x32xf32>
    %268 = arith.mulf %255, %267 : vector<2x32xf32>
    %269 = arith.addf %264, %268 : vector<2x32xf32>
    %270 = math.tanh %269 : vector<2x32xf32>
    %cst_59 = arith.constant 1.000000e+00 : f32
    %271 = vector.broadcast %cst_59 : f32 to vector<2x32xf32>
    %272 = arith.subf %271, %263 : vector<2x32xf32>
    %273 = arith.mulf %272, %270 : vector<2x32xf32>
    %274 = arith.mulf %263, %242 : vector<2x32xf32>
    %275 = arith.addf %273, %274 : vector<2x32xf32>
    %276 = vector.shape_cast %275 : vector<2x32xf32> to vector<2x1x32xf32>
    %c0_60 = arith.constant 0 : index
    %c7 = arith.constant 7 : index
    %c0_61 = arith.constant 0 : index
    %277 = vector.load %arg11[%c0_60, %c7, %c0_61] : memref<2x8x32xf32, #tpu.memory_space<vmem>>, vector<2x1x32xf32>
    tpu.vector_store %arg11[%c0_60, %c7, %c0_61], %276 {strides = array<i32>} : memref<2x8x32xf32, #tpu.memory_space<vmem>>, vector<2x1x32xf32>,
    %c0_62 = arith.constant 0 : index
    %c0_63 = arith.constant 0 : index
    %278 = vector.load %arg10[%c0_62, %c0_63] : memref<2x32xf32, #tpu.memory_space<vmem>>, vector<2x32xf32>
    tpu.vector_store %arg10[%c0_62, %c0_63], %275 {strides = array<i32>} : memref<2x32xf32, #tpu.memory_space<vmem>>, vector<2x32xf32>,
    %c0_64 = arith.constant 0 : index
    %c0_65 = arith.constant 0 : index
    %c0_66 = arith.constant 0 : index
    %279 = vector.load %arg11[%c0_64, %c0_65, %c0_66] : memref<2x8x32xf32, #tpu.memory_space<vmem>>, vector<2x8x32xf32>
    %280 = vector.shape_cast %279 : vector<2x8x32xf32> to vector<16x32xf32>
    %c0_67 = arith.constant 0 : index
    %c0_68 = arith.constant 0 : index
    %281 = vector.load %arg7[%c0_67, %c0_68] : memref<32x4xf32, #tpu.memory_space<vmem>>, vector<32x4xf32>
    %cst_69 = arith.constant dense<0.000000e+00> : vector<16x4xf32>
    %282 = tpu.matmul %280, %281, %cst_69 {dimension_numbers = #tpu.dot_dimension_numbers<[1], [0], [0], [1], [0, 0, 1, 1], [], []>} : vector<16x32xf32>, vector<32x4xf32>, vector<16x4xf32> -> vector<16x4xf32>
    %c0_70 = arith.constant 0 : index
    %c0_71 = arith.constant 0 : index
    %283 = vector.load %arg8[%c0_70, %c0_71] : memref<1x4xf32, #tpu.memory_space<vmem>>, vector<1x4xf32>
    %284 = vector.broadcast %283 : vector<1x4xf32> to vector<16x4xf32>
    %285 = arith.addf %282, %284 : vector<16x4xf32>
    %286 = vector.shape_cast %285 : vector<16x4xf32> to vector<2x8x4xf32>
    %c0_72 = arith.constant 0 : index
    %c0_73 = arith.constant 0 : index
    %c0_74 = arith.constant 0 : index
    %287 = vector.load %arg9[%c0_72, %c0_73, %c0_74] : memref<2x8x4xf32, #tpu.memory_space<vmem>>, vector<2x8x4xf32>
    tpu.vector_store %arg9[%c0_72, %c0_73, %c0_74], %286 {strides = array<i32>} : memref<2x8x4xf32, #tpu.memory_space<vmem>>, vector<2x8x4xf32>,
    return
  }
  func.func @transform_0(%arg0: i32, %arg1: i32) -> (i32, i32, i32) {
    %c0_i32 = arith.constant 0 : i32
    %c0_i32_0 = arith.constant 0 : i32
    return %arg0, %arg1, %c0_i32 : i32, i32, i32
  }
  func.func @transform_1(%arg0: i32, %arg1: i32) -> (i32, i32) {
    %c0_i32 = arith.constant 0 : i32
    %c0_i32_0 = arith.constant 0 : i32
    %c0_i32_1 = arith.constant 0 : i32
    return %c0_i32, %c0_i32_0 : i32, i32
  }
  func.func @transform_2(%arg0: i32, %arg1: i32) -> (i32, i32) {
    %c0_i32 = arith.constant 0 : i32
    %c0_i32_0 = arith.constant 0 : i32
    %c0_i32_1 = arith.constant 0 : i32
    return %c0_i32, %c0_i32_0 : i32, i32
  }
  func.func @transform_3(%arg0: i32, %arg1: i32) -> (i32, i32) {
    %c0_i32 = arith.constant 0 : i32
    %c0_i32_0 = arith.constant 0 : i32
    %c0_i32_1 = arith.constant 0 : i32
    return %c0_i32, %c0_i32_0 : i32, i32
  }
  func.func @transform_4(%arg0: i32, %arg1: i32) -> (i32, i32) {
    %c0_i32 = arith.constant 0 : i32
    %c0_i32_0 = arith.constant 0 : i32
    %c0_i32_1 = arith.constant 0 : i32
    return %c0_i32, %c0_i32_0 : i32, i32
  }
  func.func @transform_5(%arg0: i32, %arg1: i32) -> (i32, i32) {
    %c0_i32 = arith.constant 0 : i32
    %c0_i32_0 = arith.constant 0 : i32
    %c0_i32_1 = arith.constant 0 : i32
    return %c0_i32, %c0_i32_0 : i32, i32
  }
  func.func @transform_6(%arg0: i32, %arg1: i32) -> (i32, i32) {
    %c0_i32 = arith.constant 0 : i32
    %c0_i32_0 = arith.constant 0 : i32
    %c0_i32_1 = arith.constant 0 : i32
    return %c0_i32, %c0_i32_0 : i32, i32
  }
  func.func @transform_7(%arg0: i32, %arg1: i32) -> (i32, i32, i32) {
    %c0_i32 = arith.constant 0 : i32
    %c0_i32_0 = arith.constant 0 : i32
    return %arg0, %arg1, %c0_i32 : i32, i32, i32
  }
}

</mosaic_0001>

<llo_original>
// kernel: tpu_custom_call.1
$region0: #{tpu_custom_call.1}
  #allocation0 [shape = 'u32[]', space=smem, size = 0x4, offset = 0x4, fixed_abs, tag = 'smem constant byte address 0x4 - core index']
  #allocation1 [shape = 'u32[144,128]{1,0:T(1,128)}', space=vmem, size = 0x12000, scoped, tag = 'internal scratch']
  #allocation2 [shape = 'f32[2,32]{1,0:T(2,128)}', space=vmem, size = 0x400, scoped, tag = 'scratch operand']
  #allocation3 [shape = 'f32[2,8,32]{2,1,0:T(8,128)}', space=vmem, size = 0x2000, scoped, tag = 'scratch operand']
  %s0 = inlined_call_operand.vmem [shape: f32[2,16,32], index: 0, kind: input, shape index: {}]
  %s1 = inlined_call_operand.hbm [shape: f32[32,96], index: 1, kind: input, shape index: {}]
  %s2 = inlined_call_operand.vmem [shape: f32[1,96], index: 2, kind: input, shape index: {}]
  %s3 = inlined_call_operand.hbm [shape: f32[32,96], index: 3, kind: input, shape index: {}]
  %s4 = inlined_call_operand.vmem [shape: f32[1,32], index: 4, kind: input, shape index: {}]
  %s5 = inlined_call_operand.vmem [shape: f32[32,4], index: 5, kind: input, shape index: {}]
  %s6 = inlined_call_operand.vmem [shape: f32[1,4], index: 6, kind: input, shape index: {}]
  %s7 = inlined_call_operand.vmem [shape: f32[2,16,4], index: 7, kind: output, shape index: {}]
  %s8 = sld [smem:[#allocation0]]
  $region145: #{tpu_custom_call.1} parent=0
    _
  %s10 = ssub.s32 1, %s8
  %s11 = scalar_select 0, %s10, %s8
  $region1: #{tpu_custom_call.1} parent=0
    #allocation4 [shape = 'u8[16384]{0}', space=vmem, size = 0x4000, scoped, tag = 'input window, operand 0']
    #allocation5 [shape = 'u8[16384]{0}', space=vmem, size = 0x4000, scoped, tag = 'input window, operand 1, single buffered']
    #allocation6 [shape = 's32[2]{0}', space=sflag, size = 0x8, scoped, tag = 'scoped memory for tpu_custom_call.1']
    #allocation7 [shape = 'u8[16384]{0}', space=vmem, size = 0x4000, scoped, tag = 'input window, operand 3, single buffered']
    #allocation8 [shape = 's32[1]{0}', space=sflag, size = 0x4, scoped, tag = 'scoped memory for tpu_custom_call.1']
    #allocation9 [shape = 'u8[16384]{0}', space=vmem, size = 0x4000, scoped, tag = 'output window, operand 0']
    %12 = vsyncpa [#allocation6], 0
    %13 = vsyncpa [#allocation8], 0
    loop: start=0, step=1, limit=4
    $region2: #{tpu_custom_call.1} parent=1 // loop_pre_header
      _
    $region3: #{tpu_custom_call.1} parent=1 // loop_header
      %s15 = sphi 0, %s19
      %p16 = scmp.ge.s32.totalorder %s15, 4
      %s22 = sphi 0, %s34
      %s23 = sphi 0, %s30
      %s24 = sphi 0, %s22
      %s25 = sphi 0, %s23
      %s26 = sphi 0, %s24
      %s27 = sphi 0, %s25
      %s39 = sphi 0, %s41
      %s42 = sphi 0, %s39
      %s43 = sphi 0, %s42
      %s59 = sphi 0, %s43
      %s63 = sphi 0, %s63
      %s65 = sphi 0, %s63
      %s66 = sphi 0, %s65
      %s80 = sphi 0, %s66
      %s84 = sphi 0, %s84
      %s86 = sphi 0, %s84
      %s87 = sphi 0, %s86
      %s101 = sphi 0, %s87
      %s105 = sphi 0, %s105
      %s107 = sphi 0, %s105
      %s108 = sphi 0, %s107
      %s122 = sphi 0, %s108
      %s126 = sphi 0, %s126
      %s128 = sphi 0, %s126
      %s129 = sphi 0, %s128
      %s143 = sphi 0, %s129
      %s147 = sphi 0, %s147
      %s149 = sphi 0, %s147
      %s150 = sphi 0, %s149
      %s164 = sphi 0, %s150
      %s168 = sphi 0, %s168
      %s170 = sphi 0, %s168
      %s171 = sphi 0, %s170
      %s185 = sphi 0, %s171
      %s193 = sphi 0, %s195
      %s196 = sphi 0, %s193
      %s197 = sphi 0, %s196
      %s213 = sphi 0, %s197
    $region4: #{tpu_custom_call.1} parent=1 // loop_header_branch
      %18 = sbr.rel (%p16) target = $region8
    $region5: #{tpu_custom_call.1} parent=1 // loop_body
      %s20 = ssub.s32 %s15, 1
      %s21 = ssub.s32 %s15, 2
      %s28 = sadd.s32 1, %s23
      %p29 = scmp.ge.s32.totalorder %s28, 2
      %s30 = scalar_select %p29, 0, %s28
      %s31 = sadd.s32 1, %s22
      %s32 = scalar_select %p29, %s31, %s22
      %p33 = scmp.ge.s32.totalorder %s32, 1
      %s34 = scalar_select %p33, 0, %s32
      %s35 = ssub.s32 %s22, %s34
      %s36 = ssub.s32 %s23, %s30
      %s37 = sor.u32 %s35, %s36
      %p38 = scmp.eq.s32.totalorder %s37, 0
      %s40 = sadd.s32 %s39, 1
      %s41 = scalar_select %p38, %s39, %s40
      %p44 = pneg %p38
      %p45 = scmp.eq.s32.totalorder %s15, 1
      %p46 = por %p44, %p45
      %p47 = scmp.ne.s32.totalorder %s39, %s42
      %p48 = scmp.eq.s32.totalorder %s15, 0
      %p49 = por %p47, %p48
      %p50 = scmp.ne.s32.totalorder %s39, %s42
      %p51 = scmp.eq.s32.totalorder %s20, 1
      %p52 = por %p50, %p51
      %p53 = scmp.ne.s32.totalorder %s42, %s43
      %p54 = scmp.eq.s32.totalorder %s20, 0
      %p55 = por %p53, %p54
      %p56 = scmp.ne.s32.totalorder %s42, %s43
      %p57 = scmp.eq.s32.totalorder %s21, 1
      %p58 = por %p56, %p57
      %p60 = scmp.ne.s32.totalorder %s43, %s59
      %p61 = scmp.eq.s32.totalorder %s21, 0
      %p62 = por %p60, %p61
      %s64 = sadd.s32 %s63, 1
      %p67 = scmp.eq.s32.totalorder %s15, 1
      %p68 = scmp.ne.s32.totalorder %s63, %s65
      %p69 = scmp.eq.s32.totalorder %s15, 0
      %p70 = por %p68, %p69
      %p71 = scmp.ne.s32.totalorder %s63, %s65
      %p72 = scmp.eq.s32.totalorder %s20, 1
      %p73 = por %p71, %p72
      %p74 = scmp.ne.s32.totalorder %s65, %s66
      %p75 = scmp.eq.s32.totalorder %s20, 0
      %p76 = por %p74, %p75
      %p77 = scmp.ne.s32.totalorder %s65, %s66
      %p78 = scmp.eq.s32.totalorder %s21, 1
      %p79 = por %p77, %p78
      %p81 = scmp.ne.s32.totalorder %s66, %s80
      %p82 = scmp.eq.s32.totalorder %s21, 0
      %p83 = por %p81, %p82
      %s85 = sadd.s32 %s84, 1
      %p88 = scmp.eq.s32.totalorder %s15, 1
      %p89 = scmp.ne.s32.totalorder %s84, %s86
      %p90 = scmp.eq.s32.totalorder %s15, 0
      %p91 = por %p89, %p90
      %p92 = scmp.ne.s32.totalorder %s84, %s86
      %p93 = scmp.eq.s32.totalorder %s20, 1
      %p94 = por %p92, %p93
      %p95 = scmp.ne.s32.totalorder %s86, %s87
      %p96 = scmp.eq.s32.totalorder %s20, 0
      %p97 = por %p95, %p96
      %p98 = scmp.ne.s32.totalorder %s86, %s87
      %p99 = scmp.eq.s32.totalorder %s21, 1
      %p100 = por %p98, %p99
      %p102 = scmp.ne.s32.totalorder %s87, %s101
      %p103 = scmp.eq.s32.totalorder %s21, 0
      %p104 = por %p102, %p103
      %s106 = sadd.s32 %s105, 1
      %p109 = scmp.eq.s32.totalorder %s15, 1
      %p110 = scmp.ne.s32.totalorder %s105, %s107
      %p111 = scmp.eq.s32.totalorder %s15, 0
      %p112 = por %p110, %p111
      %p113 = scmp.ne.s32.totalorder %s105, %s107
      %p114 = scmp.eq.s32.totalorder %s20, 1
      %p115 = por %p113, %p114
      %p116 = scmp.ne.s32.totalorder %s107, %s108
      %p117 = scmp.eq.s32.totalorder %s20, 0
      %p118 = por %p116, %p117
      %p119 = scmp.ne.s32.totalorder %s107, %s108
      %p120 = scmp.eq.s32.totalorder %s21, 1
      %p121 = por %p119, %p120
      %p123 = scmp.ne.s32.totalorder %s108, %s122
      %p124 = scmp.eq.s32.totalorder %s21, 0
      %p125 = por %p123, %p124
      %s127 = sadd.s32 %s126, 1
      %p130 = scmp.eq.s32.totalorder %s15, 1
      %p131 = scmp.ne.s32.totalorder %s126, %s128
      %p132 = scmp.eq.s32.totalorder %s15, 0
      %p133 = por %p131, %p132
      %p134 = scmp.ne.s32.totalorder %s126, %s128
      %p135 = scmp.eq.s32.totalorder %s20, 1
      %p136 = por %p134, %p135
      %p137 = scmp.ne.s32.totalorder %s128, %s129
      %p138 = scmp.eq.s32.totalorder %s20, 0
      %p139 = por %p137, %p138
      %p140 = scmp.ne.s32.totalorder %s128, %s129
      %p141 = scmp.eq.s32.totalorder %s21, 1
      %p142 = por %p140, %p141
      %p144 = scmp.ne.s32.totalorder %s129, %s143
      %p145 = scmp.eq.s32.totalorder %s21, 0
      %p146 = por %p144, %p145
      %s148 = sadd.s32 %s147, 1
      %p151 = scmp.eq.s32.totalorder %s15, 1
      %p152 = scmp.ne.s32.totalorder %s147, %s149
      %p153 = scmp.eq.s32.totalorder %s15, 0
      %p154 = por %p152, %p153
      %p155 = scmp.ne.s32.totalorder %s147, %s149
      %p156 = scmp.eq.s32.totalorder %s20, 1
      %p157 = por %p155, %p156
      %p158 = scmp.ne.s32.totalorder %s149, %s150
      %p159 = scmp.eq.s32.totalorder %s20, 0
      %p160 = por %p158, %p159
      %p161 = scmp.ne.s32.totalorder %s149, %s150
      %p162 = scmp.eq.s32.totalorder %s21, 1
      %p163 = por %p161, %p162
      %p165 = scmp.ne.s32.totalorder %s150, %s164
      %p166 = scmp.eq.s32.totalorder %s21, 0
      %p167 = por %p165, %p166
      %s169 = sadd.s32 %s168, 1
      %p172 = scmp.eq.s32.totalorder %s15, 1
      %p173 = scmp.ne.s32.totalorder %s168, %s170
      %p174 = scmp.eq.s32.totalorder %s15, 0
      %p175 = por %p173, %p174
      %p176 = scmp.ne.s32.totalorder %s168, %s170
      %p177 = scmp.eq.s32.totalorder %s20, 1
      %p178 = por %p176, %p177
      %p179 = scmp.ne.s32.totalorder %s170, %s171
      %p180 = scmp.eq.s32.totalorder %s20, 0
      %p181 = por %p179, %p180
      %p182 = scmp.ne.s32.totalorder %s170, %s171
      %p183 = scmp.eq.s32.totalorder %s21, 1
      %p184 = por %p182, %p183
      %p186 = scmp.ne.s32.totalorder %s171, %s185
      %p187 = scmp.eq.s32.totalorder %s21, 0
      %p188 = por %p186, %p187
      %s189 = ssub.s32 %s22, %s34
      %s190 = ssub.s32 %s23, %s30
      %s191 = sor.u32 %s189, %s190
      %p192 = scmp.eq.s32.totalorder %s191, 0
      %s194 = sadd.s32 %s193, 1
      %s195 = scalar_select %p192, %s193, %s194
      %p198 = pneg %p192
      %p199 = scmp.eq.s32.totalorder %s15, 1
      %p200 = por %p198, %p199
      %p201 = scmp.ne.s32.totalorder %s193, %s196
      %p202 = scmp.eq.s32.totalorder %s15, 0
      %p203 = por %p201, %p202
      %p204 = scmp.ne.s32.totalorder %s193, %s196
      %p205 = scmp.eq.s32.totalorder %s20, 1
      %p206 = por %p204, %p205
      %p207 = scmp.ne.s32.totalorder %s196, %s197
      %p208 = scmp.eq.s32.totalorder %s20, 0
      %p209 = por %p207, %p208
      %p210 = scmp.ne.s32.totalorder %s196, %s197
      %p211 = scmp.eq.s32.totalorder %s21, 1
      %p212 = por %p210, %p211
      %p214 = scmp.ne.s32.totalorder %s197, %s213
      %p215 = scmp.eq.s32.totalorder %s21, 0
      %p216 = por %p214, %p215
      %p217 = scmp.le.s32.totalorder 1, %s15
      %p218 = scmp.lt.s32.totalorder %s15, 3
      %p219 = pnand %p217, %p218
      %p220 = pneg %p219
      // Predicated region
      $region9: #{tpu_custom_call.1} parent=5 // pred_check
        _
      $region10: #{tpu_custom_call.1} parent=5 // pred_check_branch
        %222 = sbr.rel (%p219) target = $region12
      $region11: #{tpu_custom_call.1} parent=5 // pred_region
        %s223 = ssub.s32 %s15, 1
        // Predicated region
        $region13: #{tpu_custom_call.1} parent=11 // pred_check
          %p224 = pneg %p76
        $region14: #{tpu_custom_call.1} parent=11 // pred_check_branch
          %226 = sbr.rel (%p224) target = $region16
        $region15: #{tpu_custom_call.1} parent=11 // pred_region
          %s228 = ssub.s32 512, 512
          %229 = vsyncadd [#allocation6], %s228
          %s230 = sshll.u32 [#allocation5], 4
          %s231 = int_to_ptr.vmem [resolvable:$true] %s230
          %236 = dma.hbm_to_vmem [thread:$0]  %s1, 512, %s231, [#allocation6], 128, 128, 8
        $region16: #{tpu_custom_call.1} parent=11 // pred_fallthru
          _
        // Predicated region
        $region17: #{tpu_custom_call.1} parent=11 // pred_check
          %p237 = pneg %p97
        $region18: #{tpu_custom_call.1} parent=11 // pred_check_branch
          %239 = sbr.rel (%p237) target = $region20
        $region19: #{tpu_custom_call.1} parent=11 // pred_region
          _
        $region20: #{tpu_custom_call.1} parent=11 // pred_fallthru
          _
        // Predicated region
        $region21: #{tpu_custom_call.1} parent=11 // pred_check
          %p240 = pneg %p118
        $region22: #{tpu_custom_call.1} parent=11 // pred_check_branch
          %242 = sbr.rel (%p240) target = $region24
        $region23: #{tpu_custom_call.1} parent=11 // pred_region
          %s244 = ssub.s32 512, 512
          %245 = vsyncadd [#allocation8], %s244
          %s246 = sshll.u32 [#allocation7], 4
          %s247 = int_to_ptr.vmem [resolvable:$true] %s246
          %252 = dma.hbm_to_vmem [thread:$0]  %s3, 512, %s247, [#allocation8], 128, 128, 8
        $region24: #{tpu_custom_call.1} parent=11 // pred_fallthru
          _
        // Predicated region
        $region25: #{tpu_custom_call.1} parent=11 // pred_check
          %p253 = pneg %p139
        $region26: #{tpu_custom_call.1} parent=11 // pred_check_branch
          %255 = sbr.rel (%p253) target = $region28
        $region27: #{tpu_custom_call.1} parent=11 // pred_region
          _
        $region28: #{tpu_custom_call.1} parent=11 // pred_fallthru
          _
        // Predicated region
        $region29: #{tpu_custom_call.1} parent=11 // pred_check
          %p256 = pneg %p160
        $region30: #{tpu_custom_call.1} parent=11 // pred_check_branch
          %258 = sbr.rel (%p256) target = $region32
        $region31: #{tpu_custom_call.1} parent=11 // pred_region
          _
        $region32: #{tpu_custom_call.1} parent=11 // pred_fallthru
          _
        // Predicated region
        $region33: #{tpu_custom_call.1} parent=11 // pred_check
          %p259 = pneg %p181
        $region34: #{tpu_custom_call.1} parent=11 // pred_check_branch
          %261 = sbr.rel (%p259) target = $region36
        $region35: #{tpu_custom_call.1} parent=11 // pred_region
          _
        $region36: #{tpu_custom_call.1} parent=11 // pred_fallthru
          _
      $region12: #{tpu_custom_call.1} parent=5 // pred_fallthru
        _
      %p262 = scmp.lt.s32.totalorder %s15, 2
      // Predicated region
      $region37: #{tpu_custom_call.1} parent=5 // pred_check
        %p263 = pneg %p262
      $region38: #{tpu_custom_call.1} parent=5 // pred_check_branch
        %265 = sbr.rel (%p263) target = $region40
      $region39: #{tpu_custom_call.1} parent=5 // pred_region
        // Predicated region
        $region41: #{tpu_custom_call.1} parent=39 // pred_check
          %p266 = pneg %p49
        $region42: #{tpu_custom_call.1} parent=39 // pred_check_branch
          %268 = sbr.rel (%p266) target = $region44
        $region43: #{tpu_custom_call.1} parent=39 // pred_region
          %s269 = sand.u32 %s39, 1
          %s270 = sand.u32 %s39, 1
          %s271 = smul.addr %s270, 16
          %s272 = scalar_lea.vmem [#allocation4], %s271
          %s273 = smul.u32 2, %s22
          %s274 = smul.addr %s273, 2
          %s275 = sadd.s32 %s23, %s274
          %s276 = smul.addr %s275, 8
          %s277 = scalar_lea.vmem %s0, %s276
          // Predicated region
          $region45: #{tpu_custom_call.1} parent=43 // pred_check
            _
          $region46: #{tpu_custom_call.1} parent=43 // pred_check_branch
            %279 = sbr.rel (0) target = $region48
          $region47: #{tpu_custom_call.1} parent=43 // pred_region
            // Predicated region
            $region49: #{tpu_custom_call.1} parent=47 // pred_check
              _
            $region50: #{tpu_custom_call.1} parent=47 // pred_check_branch
              %281 = sbr.rel (0) target = $region52
            $region51: #{tpu_custom_call.1} parent=47 // pred_region
              // Predicated region
              $region64: #{tpu_custom_call.1} parent=51 // pred_check
                _
              $region65: #{tpu_custom_call.1} parent=51 // pred_check_branch
                %299 = sbr.rel (0) target = $region67
              $region66: #{tpu_custom_call.1} parent=51 // pred_region
                loop: start=0, step=1, limit=1
                $region68: #{tpu_custom_call.1} parent=66 // loop_pre_header
                  _
                $region69: #{tpu_custom_call.1} parent=66 // loop_header
                  %s301 = sphi 0, %s305
                  %p302 = scmp.ge.s32.totalorder %s301, 1
                  %s306 = sphi %s277, %s277
                  %s307 = sphi %s272, %s272
                $region70: #{tpu_custom_call.1} parent=66 // loop_header_branch
                  %304 = sbr.rel (%p302) target = $region74
                $region71: #{tpu_custom_call.1} parent=66 // loop_body
                  %v308 = vld [vmem:[%s306] sm:$0xff]
                  %309 = vst [vmem:[%s307] sm:$0xff] %v308
                  %v310 = vld [vmem:[%s306 + $0x10] sm:$0xff]
                  %311 = vst [vmem:[%s307 + $0x8] sm:$0xff] %v310
                $region72: #{tpu_custom_call.1} parent=66 // loop_footer
                  %s305 = sadd.s32 1, %s301
                $region73: #{tpu_custom_call.1} parent=66 // loop_footer_branch
                  %300 = sbr.rel target = $region69
                $region74: #{tpu_custom_call.1} parent=66 // loop_exit
                  _
              $region67: #{tpu_custom_call.1} parent=51 // pred_fallthru
                _
              // Predicated region
              $region75: #{tpu_custom_call.1} parent=51 // pred_check
                _
              $region76: #{tpu_custom_call.1} parent=51 // pred_check_branch
                %313 = sbr.rel target = $region78
              $region77: #{tpu_custom_call.1} parent=51 // pred_region
                _
              $region78: #{tpu_custom_call.1} parent=51 // pred_fallthru
                _
            $region52: #{tpu_custom_call.1} parent=47 // pred_fallthru
              _
            // Predicated region
            $region53: #{tpu_custom_call.1} parent=47 // pred_check
              _
            $region54: #{tpu_custom_call.1} parent=47 // pred_check_branch
              %283 = sbr.rel target = $region56
            $region55: #{tpu_custom_call.1} parent=47 // pred_region
              %s285 = ssub.s32 256, 1
              loop: start=0, step=1, limit=1
              $region57: #{tpu_custom_call.1} parent=55 // loop_pre_header
                _
              $region58: #{tpu_custom_call.1} parent=55 // loop_header
                %s287 = sphi 0, %s291
                %p288 = scmp.ge.s32.totalorder %s287, 1
                %s292 = sphi %s277, %s277
                %s293 = sphi %s272, %s272
              $region59: #{tpu_custom_call.1} parent=55 // loop_header_branch
                %290 = sbr.rel (%p288) target = $region63
              $region60: #{tpu_custom_call.1} parent=55 // loop_body
                %v294 = vld [vmem:[%s292] sm:%s285]
                %295 = vst [vmem:[%s293] sm:%s285] %v294
                %v296 = vld [vmem:[%s292 + $0x10] sm:%s285]
                %297 = vst [vmem:[%s293 + $0x8] sm:%s285] %v296
              $region61: #{tpu_custom_call.1} parent=55 // loop_footer
                %s291 = sadd.s32 1, %s287
              $region62: #{tpu_custom_call.1} parent=55 // loop_footer_branch
                %286 = sbr.rel target = $region58
              $region63: #{tpu_custom_call.1} parent=55 // loop_exit
                _
            $region56: #{tpu_custom_call.1} parent=47 // pred_fallthru
              _
          $region48: #{tpu_custom_call.1} parent=43 // pred_fallthru
            _
          %314 = vnop
        $region44: #{tpu_custom_call.1} parent=39 // pred_fallthru
          _
      $region40: #{tpu_custom_call.1} parent=5 // pred_fallthru
        _
      %p315 = scmp.le.s32.totalorder 1, %s15
      %p316 = scmp.lt.s32.totalorder %s15, 3
      %p317 = pnand %p315, %p316
      %p318 = pneg %p317
      // Predicated region
      $region79: #{tpu_custom_call.1} parent=5 // pred_check
        _
      $region80: #{tpu_custom_call.1} parent=5 // pred_check_branch
        %320 = sbr.rel (%p317) target = $region82
      $region81: #{tpu_custom_call.1} parent=5 // pred_region
        %s321 = ssub.s32 %s15, 1
        %s322 = sand.u32 %s42, 1
        %s323 = sand.u32 %s42, 1
        %s324 = smul.addr %s323, 16
        %s325 = scalar_lea.vmem [#allocation4], %s324
        // Predicated region
        $region83: #{tpu_custom_call.1} parent=81 // pred_check
          %p326 = pneg %p55
        $region84: #{tpu_custom_call.1} parent=81 // pred_check_branch
          %328 = sbr.rel (%p326) target = $region86
        $region85: #{tpu_custom_call.1} parent=81 // pred_region
          _
        $region86: #{tpu_custom_call.1} parent=81 // pred_fallthru
          _
        // Predicated region
        $region87: #{tpu_custom_call.1} parent=81 // pred_check
          %p329 = pneg %p76
        $region88: #{tpu_custom_call.1} parent=81 // pred_check_branch
          %331 = sbr.rel (%p329) target = $region90
        $region89: #{tpu_custom_call.1} parent=81 // pred_region
          %332 = dma.done [#allocation6], 512
        $region90: #{tpu_custom_call.1} parent=81 // pred_fallthru
          _
        // Predicated region
        $region91: #{tpu_custom_call.1} parent=81 // pred_check
          %p333 = pneg %p118
        $region92: #{tpu_custom_call.1} parent=81 // pred_check_branch
          %335 = sbr.rel (%p333) target = $region94
        $region93: #{tpu_custom_call.1} parent=81 // pred_region
          %336 = dma.done [#allocation8], 512
        $region94: #{tpu_custom_call.1} parent=81 // pred_fallthru
          _
        %s337 = sand.u32 %s42, 1
        %s338 = sand.u32 %s42, 1
        %s339 = smul.addr %s338, 16
        %s340 = scalar_lea.vmem [#allocation4], %s339
        %p341 = pneg %p55
        %p342 = pneg %p52
        %p343 = pneg %p76
        %p344 = pneg %p73
        %p345 = pneg %p97
        %p346 = pneg %p94
        %p347 = pneg %p118
        %p348 = pneg %p115
        %p349 = pneg %p139
        %p350 = pneg %p136
        %p351 = pneg %p160
        %p352 = pneg %p157
        %p353 = pneg %p181
        %p354 = pneg %p178
        %p355 = pneg %p209
        %p356 = pneg %p206
        %s357 = sand.u32 %s196, 1
        %s358 = sand.u32 %s196, 1
        %s359 = smul.addr %s358, 16
        %s360 = scalar_lea.vmem [#allocation9], %s359
        %s361 = smul.u32 2, %s24
        %s362 = smul.u32 2, %s24
        %p363 = scmp.eq.s32.totalorder %s25, 0
        // Predicated region
        $region95: #{tpu_custom_call.1} parent=81 // pred_check
          %p364 = pneg %p363
        $region96: #{tpu_custom_call.1} parent=81 // pred_check_branch
          %366 = sbr.rel (%p364) target = $region98
        $region97: #{tpu_custom_call.1} parent=81 // pred_region
          %vm367 = vcmask 254976
          %368 = vst.msk [vmem:[#allocation2] sm:$0x3] %vm367, 0.0
        $region98: #{tpu_custom_call.1} parent=81 // pred_fallthru
          _
        %v369 = vld [vmem:[%s325] sm:$0xff]
        %v370 = vld [vmem:[%s325 + $0x8] sm:$0xff]
        %v371 = vld [vmem:[#allocation5] sm:$0xff]
        %v372 = vld [vmem:[#allocation5 + $0x8] sm:$0xff]
        %v373 = vld [vmem:[#allocation5 + $0x10] sm:$0xff]
        %v374 = vld [vmem:[#allocation5 + $0x18] sm:$0xff]
        %v375 = vld [vmem:[%s2] sm:$0x1]
        %v377 = vlaneseq
        %v378 = vshrl.u32 %v377, 7
        %v379 = vsub.s32 0, %v378
        %v380 = vrot.slane %v375, %v379
        %vm382 = vcmask 261120
        %v384 = vsel %vm382, %v369, 0
        %v387 = vsel %vm382, %v370, 0
        %389 = vmatprep.subr.mxu0 0.0
        %390 = vmatpush1.msra.mxu0 0.0
        %391 = vmatprep.subr.mxu0 0.0
        %392 = vmatpush1.msra.mxu0 0.0
        %393 = vmatprep.subr.mxu0 0.0
        %394 = vmatpush1.msra.mxu0 0.0
        %395 = vmatprep.subr.mxu0 0.0
        %396 = vmatpush1.msra.mxu0 0.0
        %397 = vmatprep.subr.mxu0 0.0
        %398 = vmatpush1.msra.mxu0 0.0
        %399 = vmatprep.subr.mxu0 0.0
        %400 = vmatpush1.msra.mxu0 0.0
        %401 = vmatprep.subr.mxu0 0.0
        %402 = vmatpush1.msra.mxu0 0.0
        %403 = vmatprep.subr.mxu0 0.0
        %404 = vmatpush1.msra.mxu0 0.0
        %405 = vmatprep.subr.mxu0 0.0
        %406 = vmatpush1.msra.mxu0 0.0
        %407 = vmatprep.subr.mxu0 0.0
        %408 = vmatpush1.msra.mxu0 0.0
        %409 = vmatprep.subr.mxu0 0.0
        %410 = vmatpush1.msra.mxu0 0.0
        %411 = vmatprep.subr.mxu0 0.0
        %412 = vmatpush1.msra.mxu0 0.0
        %413 = vmatprep.subr.mxu0 0.0
        %414 = vmatpush1.msra.mxu0 %v374
        %415 = vmatprep.subr.mxu0 0.0
        %416 = vmatpush1.msra.mxu0 %v373
        %417 = vmatprep.subr.mxu0 0.0
        %418 = vmatpush1.msra.mxu0 %v372
        %419 = vmatprep.subr.mxu0 0.0
        %420 = vmatpush1.msra.mxu0 %v371
        %421 = vmatprep.subr.mxu0 0.0
        %422 = vmatpush2.msra.mxu0 0.0
        %423 = vmatprep.subr.mxu0 0.0
        %424 = vmatpush2.msra.mxu0 0.0
        %425 = vmatprep.subr.mxu0 0.0
        %426 = vmatpush2.msra.mxu0 0.0
        %427 = vmatprep.subr.mxu0 0.0
        %428 = vmatpush2.msra.mxu0 0.0
        %429 = vmatprep.subr.mxu0 0.0
        %430 = vmatpush2.msra.mxu0 0.0
        %431 = vmatprep.subr.mxu0 0.0
        %432 = vmatpush2.msra.mxu0 0.0
        %433 = vmatprep.subr.mxu0 0.0
        %434 = vmatpush2.msra.mxu0 0.0
        %435 = vmatprep.subr.mxu0 0.0
        %436 = vmatpush2.msra.mxu0 0.0
        %437 = vmatprep.subr.mxu0 0.0
        %438 = vmatpush2.msra.mxu0 0.0
        %439 = vmatprep.subr.mxu0 0.0
        %440 = vmatpush2.msra.mxu0 0.0
        %441 = vmatprep.subr.mxu0 0.0
        %442 = vmatpush2.msra.mxu0 0.0
        %443 = vmatprep.subr.mxu0 0.0
        %444 = vmatpush2.msra.mxu0 0.0
        %445 = vmatprep.subr.mxu0 0.0
        %446 = vmatpush2.msra.mxu0 0.0
        %447 = vmatprep.subr.mxu0 0.0
        %448 = vmatpush2.msra.mxu0 0.0
        %449 = vmatprep.subr.mxu0 0.0
        %450 = vmatpush2.msra.mxu0 0.0
        %451 = vmatprep.subr.mxu0 0.0
        %452 = vmatpush2.msra.mxu0 0.0
        %453 = vmatprep.mubr.f32.mxu0 0.0
        %454 = vmatmul.mubr.f32.gmra.mxu0 %v384
        %v455 = vpop.f32.mrf.mxu0
        %v456 = vadd.f32 %v380, %v455
        %v457 = vpop.f32.mrf.mxu0
        %458 = vmatprep.mubr.f32.mxu0 0.0
        %459 = vmatmul.mubr.f32.gmra.mxu0 %v387
        %v460 = vpop.f32.mrf.mxu0
        %v461 = vadd.f32 %v380, %v460
        %v462 = vpop.f32.mrf.mxu0
        %463 = vdwg.mxu0
        %v464 = vld [vmem:[#allocation7] sm:$0xff]
        %v465 = vld [vmem:[#allocation7 + $0x8] sm:$0xff]
        %v466 = vld [vmem:[#allocation7 + $0x10] sm:$0xff]
        %v467 = vld [vmem:[#allocation7 + $0x18] sm:$0xff]
        %v468 = vld [vmem:[%s4] sm:$0x1]
        %v469 = vld [vmem:[#allocation2] sm:$0x3]
        %v471 = vsel %vm382, %v469, 0
        %473 = vmatprep.subr.mxu0 0.0
        %474 = vmatpush1.msra.mxu0 0.0
        %475 = vmatprep.subr.mxu0 0.0
        %476 = vmatpush1.msra.mxu0 0.0
        %477 = vmatprep.subr.mxu0 0.0
        %478 = vmatpush1.msra.mxu0 0.0
        %479 = vmatprep.subr.mxu0 0.0
        %480 = vmatpush1.msra.mxu0 0.0
        %481 = vmatprep.subr.mxu0 0.0
        %482 = vmatpush1.msra.mxu0 0.0
        %483 = vmatprep.subr.mxu0 0.0
        %484 = vmatpush1.msra.mxu0 0.0
        %485 = vmatprep.subr.mxu0 0.0
        %486 = vmatpush1.msra.mxu0 0.0
        %487 = vmatprep.subr.mxu0 0.0
        %488 = vmatpush1.msra.mxu0 0.0
        %489 = vmatprep.subr.mxu0 0.0
        %490 = vmatpush1.msra.mxu0 0.0
        %491 = vmatprep.subr.mxu0 0.0
        %492 = vmatpush1.msra.mxu0 0.0
        %493 = vmatprep.subr.mxu0 0.0
        %494 = vmatpush1.msra.mxu0 0.0
        %495 = vmatprep.subr.mxu0 0.0
        %496 = vmatpush1.msra.mxu0 0.0
        %497 = vmatprep.subr.mxu0 0.0
        %498 = vmatpush1.msra.mxu0 %v467
        %499 = vmatprep.subr.mxu0 0.0
        %500 = vmatpush1.msra.mxu0 %v466
        %501 = vmatprep.subr.mxu0 0.0
        %502 = vmatpush1.msra.mxu0 %v465
        %503 = vmatprep.subr.mxu0 0.0
        %504 = vmatpush1.msra.mxu0 %v464
        %505 = vmatprep.subr.mxu0 0.0
        %506 = vmatpush2.msra.mxu0 0.0
        %507 = vmatprep.subr.mxu0 0.0
        %508 = vmatpush2.msra.mxu0 0.0
        %509 = vmatprep.subr.mxu0 0.0
        %510 = vmatpush2.msra.mxu0 0.0
        %511 = vmatprep.subr.mxu0 0.0
        %512 = vmatpush2.msra.mxu0 0.0
        %513 = vmatprep.subr.mxu0 0.0
        %514 = vmatpush2.msra.mxu0 0.0
        %515 = vmatprep.subr.mxu0 0.0
        %516 = vmatpush2.msra.mxu0 0.0
        %517 = vmatprep.subr.mxu0 0.0
        %518 = vmatpush2.msra.mxu0 0.0
        %519 = vmatprep.subr.mxu0 0.0
        %520 = vmatpush2.msra.mxu0 0.0
        %521 = vmatprep.subr.mxu0 0.0
        %522 = vmatpush2.msra.mxu0 0.0
        %523 = vmatprep.subr.mxu0 0.0
        %524 = vmatpush2.msra.mxu0 0.0
        %525 = vmatprep.subr.mxu0 0.0
        %526 = vmatpush2.msra.mxu0 0.0
        %527 = vmatprep.subr.mxu0 0.0
        %528 = vmatpush2.msra.mxu0 0.0
        %529 = vmatprep.subr.mxu0 0.0
        %530 = vmatpush2.msra.mxu0 0.0
        %531 = vmatprep.subr.mxu0 0.0
        %532 = vmatpush2.msra.mxu0 0.0
        %533 = vmatprep.subr.mxu0 0.0
        %534 = vmatpush2.msra.mxu0 0.0
        %535 = vmatprep.subr.mxu0 0.0
        %536 = vmatpush2.msra.mxu0 0.0
        %537 = vmatprep.mubr.f32.mxu0 0.0
        %538 = vmatmul.mubr.f32.gmra.mxu0 %v471
        %v539 = vpop.f32.mrf.mxu0
        %v540 = vadd.f32 0.0, %v539
        %v541 = vpop.f32.mrf.mxu0
        %542 = vdwg.mxu0
        %v544 = vrot.slane %v540, 1
        %v547 = vadd.f32 %v456, %v540
        %v548 = vadd.f32 %v461, %v544
        %v549 = vxor.u32 %v547, 2147483648
        %v550 = vxor.u32 %v548, 2147483648
        %v551 = vmul.f32 %v549, 1.442695
        %v552 = vpow.pop %v551
        %v553 = vmul.f32 %v550, 1.442695
        %v554 = vpow.pop %v553
        %v555 = vadd.f32 %v552, 1.0
        %v556 = vadd.f32 %v554, 1.0
        %v557 = vrcp.pop %v555
        %v558 = vmul.f32 1.0, %v557
        %v559 = vrcp.pop %v556
        %v560 = vmul.f32 1.0, %v559
        %v562 = vlaneseq
        %v563 = vshrl.u32 %v562, 7
        %v564 = vsub.s32 0, %v563
        %v565 = vrot.slane %v468, %v564
        %566 = vrot.lane.b32.xlu0 %v565, 64
        %v567 = vpop.permute.xlu0 %566
        %v569 = vadd.f32 %v540, %v567
        %v571 = vrot.slane %v569, 1
        %572 = vrot.lane.b32.xlu0 %v569, 64
        %v573 = vpop.permute.xlu0 %572
        %574 = vrot.lane.b32.xlu0 %v571, 64
        %v575 = vpop.permute.xlu0 %574
        %v578 = vmul.f32 %v558, %v573
        %v579 = vmul.f32 %v560, %v575
        %582 = vrot.lane.b32.xlu0 %v578, 64
        %v583 = vpop.permute.xlu0 %582
        %584 = vrot.lane.b32.xlu0 %v579, 64
        %v585 = vpop.permute.xlu0 %584
        %v588 = vadd.f32 %v456, %v583
        %v589 = vadd.f32 %v461, %v585
        %v590 = vtanh.pop %v588
        %v591 = vtanh.pop %v589
        %v592 = vsub.f32 1.0, %v558
        %v593 = vsub.f32 1.0, %v560
        %596 = vrot.lane.b32.xlu0 %v590, 96
        %v597 = vpop.permute.xlu0 %596
        %598 = vrot.lane.b32.xlu0 %v591, 96
        %v599 = vpop.permute.xlu0 %598
        %v602 = vmul.f32 %v592, %v597
        %v603 = vmul.f32 %v593, %v599
        %v604 = vrot.slane %v469, 1
        %605 = vrot.lane.b32.xlu0 %v469, 32
        %v606 = vpop.permute.xlu0 %605
        %607 = vrot.lane.b32.xlu0 %v604, 32
        %v608 = vpop.permute.xlu0 %607
        %v611 = vmul.f32 %v558, %v606
        %v612 = vmul.f32 %v560, %v608
        %v613 = vadd.f32 %v602, %v611
        %v614 = vadd.f32 %v603, %v612
        %617 = vrot.lane.b32.xlu0 %v613, 96
        %v618 = vpop.permute.xlu0 %617
        %619 = vrot.lane.b32.xlu0 %v614, 96
        %v620 = vpop.permute.xlu0 %619
        %vm623 = vcmask 253952
        %624 = vst.msk [vmem:[#allocation3] sm:$0x1] %vm623, %v618
        %625 = vst.msk [vmem:[#allocation3 + $0x8] sm:$0x1] %vm623, %v620
        %v626 = vrot.slane %v614, 7
        %vm627 = vcmask 1041409
        %v628 = vsel %vm627, %v626, %v613
        %629 = vrot.lane.b32.xlu0 %v628, 96
        %v630 = vpop.permute.xlu0 %629
        %v631 = vsel %vm382, %v630, 0
        %633 = vmatprep.subr.mxu0 0.0
        %634 = vmatpush1.msra.mxu0 0.0
        %635 = vmatprep.subr.mxu0 0.0
        %636 = vmatpush1.msra.mxu0 0.0
        %637 = vmatprep.subr.mxu0 0.0
        %638 = vmatpush1.msra.mxu0 0.0
        %639 = vmatprep.subr.mxu0 0.0
        %640 = vmatpush1.msra.mxu0 0.0
        %641 = vmatprep.subr.mxu0 0.0
        %642 = vmatpush1.msra.mxu0 0.0
        %643 = vmatprep.subr.mxu0 0.0
        %644 = vmatpush1.msra.mxu0 0.0
        %645 = vmatprep.subr.mxu0 0.0
        %646 = vmatpush1.msra.mxu0 0.0
        %647 = vmatprep.subr.mxu0 0.0
        %648 = vmatpush1.msra.mxu0 0.0
        %649 = vmatprep.subr.mxu0 0.0
        %650 = vmatpush1.msra.mxu0 0.0
        %651 = vmatprep.subr.mxu0 0.0
        %652 = vmatpush1.msra.mxu0 0.0
        %653 = vmatprep.subr.mxu0 0.0
        %654 = vmatpush1.msra.mxu0 0.0
        %655 = vmatprep.subr.mxu0 0.0
        %656 = vmatpush1.msra.mxu0 0.0
        %657 = vmatprep.subr.mxu0 0.0
        %658 = vmatpush1.msra.mxu0 %v467
        %659 = vmatprep.subr.mxu0 0.0
        %660 = vmatpush1.msra.mxu0 %v466
        %661 = vmatprep.subr.mxu0 0.0
        %662 = vmatpush1.msra.mxu0 %v465
        %663 = vmatprep.subr.mxu0 0.0
        %664 = vmatpush1.msra.mxu0 %v464
        %665 = vmatprep.subr.mxu0 0.0
        %666 = vmatpush2.msra.mxu0 0.0
        %667 = vmatprep.subr.mxu0 0.0
        %668 = vmatpush2.msra.mxu0 0.0
        %669 = vmatprep.subr.mxu0 0.0
        %670 = vmatpush2.msra.mxu0 0.0
        %671 = vmatprep.subr.mxu0 0.0
        %672 = vmatpush2.msra.mxu0 0.0
        %673 = vmatprep.subr.mxu0 0.0
        %674 = vmatpush2.msra.mxu0 0.0
        %675 = vmatprep.subr.mxu0 0.0
        %676 = vmatpush2.msra.mxu0 0.0
        %677 = vmatprep.subr.mxu0 0.0
        %678 = vmatpush2.msra.mxu0 0.0
        %679 = vmatprep.subr.mxu0 0.0
        %680 = vmatpush2.msra.mxu0 0.0
        %681 = vmatprep.subr.mxu0 0.0
        %682 = vmatpush2.msra.mxu0 0.0
        %683 = vmatprep.subr.mxu0 0.0
        %684 = vmatpush2.msra.mxu0 0.0
        %685 = vmatprep.subr.mxu0 0.0
        %686 = vmatpush2.msra.mxu0 0.0
        %687 = vmatprep.subr.mxu0 0.0
        %688 = vmatpush2.msra.mxu0 0.0
        %689 = vmatprep.subr.mxu0 0.0
        %690 = vmatpush2.msra.mxu0 0.0
        %691 = vmatprep.subr.mxu0 0.0
        %692 = vmatpush2.msra.mxu0 0.0
        %693 = vmatprep.subr.mxu0 0.0
        %694 = vmatpush2.msra.mxu0 0.0
        %695 = vmatprep.subr.mxu0 0.0
        %696 = vmatpush2.msra.mxu0 0.0
        %697 = vmatprep.mubr.f32.mxu0 0.0
        %698 = vmatmul.mubr.f32.gmra.mxu0 %v631
        %v699 = vpop.f32.mrf.mxu0
        %v700 = vadd.f32 0.0, %v699
        %v701 = vpop.f32.mrf.mxu0
        %702 = vdwg.mxu0
        %v704 = vrot.slane %v700, 7
        %v707 = vadd.f32 %v456, %v704
        %v708 = vadd.f32 %v461, %v700
        %v709 = vxor.u32 %v707, 2147483648
        %v710 = vxor.u32 %v708, 2147483648
        %v711 = vmul.f32 %v709, 1.442695
        %v712 = vpow.pop %v711
        %v713 = vmul.f32 %v710, 1.442695
        %v714 = vpow.pop %v713
        %v715 = vadd.f32 %v712, 1.0
        %v716 = vadd.f32 %v714, 1.0
        %v717 = vrcp.pop %v715
        %v718 = vmul.f32 1.0, %v717
        %v719 = vrcp.pop %v716
        %v720 = vmul.f32 1.0, %v719
        %v721 = vadd.f32 %v700, %v567
        %v723 = vrot.slane %v721, 7
        %724 = vrot.lane.b32.xlu0 %v723, 64
        %v725 = vpop.permute.xlu0 %724
        %726 = vrot.lane.b32.xlu0 %v721, 64
        %v727 = vpop.permute.xlu0 %726
        %v730 = vmul.f32 %v718, %v725
        %v731 = vmul.f32 %v720, %v727
        %734 = vrot.lane.b32.xlu0 %v730, 64
        %v735 = vpop.permute.xlu0 %734
        %736 = vrot.lane.b32.xlu0 %v731, 64
        %v737 = vpop.permute.xlu0 %736
        %v740 = vadd.f32 %v456, %v735
        %v741 = vadd.f32 %v461, %v737
        %v742 = vtanh.pop %v740
        %v743 = vtanh.pop %v741
        %v744 = vsub.f32 1.0, %v718
        %v745 = vsub.f32 1.0, %v720
        %748 = vrot.lane.b32.xlu0 %v742, 96
        %v749 = vpop.permute.xlu0 %748
        %750 = vrot.lane.b32.xlu0 %v743, 96
        %v751 = vpop.permute.xlu0 %750
        %v754 = vmul.f32 %v744, %v749
        %v755 = vmul.f32 %v745, %v751
        %v756 = vrot.slane %v613, 7
        %v759 = vmul.f32 %v718, %v756
        %v760 = vmul.f32 %v720, %v626
        %v761 = vadd.f32 %v754, %v759
        %v762 = vadd.f32 %v755, %v760
        %765 = vrot.lane.b32.xlu0 %v761, 96
        %v766 = vpop.permute.xlu0 %765
        %767 = vrot.lane.b32.xlu0 %v762, 96
        %v768 = vpop.permute.xlu0 %767
        %vm771 = vcmask 254977
        %772 = vst.msk [vmem:[#allocation3] sm:$0x2] %vm771, %v766
        %773 = vst.msk [vmem:[#allocation3 + $0x8] sm:$0x2] %vm771, %v768
        %v774 = vrot.slane %v761, 1
        %v775 = vsel %vm627, %v762, %v774
        %776 = vrot.lane.b32.xlu0 %v775, 96
        %v777 = vpop.permute.xlu0 %776
        %v778 = vsel %vm382, %v777, 0
        %780 = vmatprep.subr.mxu0 0.0
        %781 = vmatpush1.msra.mxu0 0.0
        %782 = vmatprep.subr.mxu0 0.0
        %783 = vmatpush1.msra.mxu0 0.0
        %784 = vmatprep.subr.mxu0 0.0
        %785 = vmatpush1.msra.mxu0 0.0
        %786 = vmatprep.subr.mxu0 0.0
        %787 = vmatpush1.msra.mxu0 0.0
        %788 = vmatprep.subr.mxu0 0.0
        %789 = vmatpush1.msra.mxu0 0.0
        %790 = vmatprep.subr.mxu0 0.0
        %791 = vmatpush1.msra.mxu0 0.0
        %792 = vmatprep.subr.mxu0 0.0
        %793 = vmatpush1.msra.mxu0 0.0
        %794 = vmatprep.subr.mxu0 0.0
        %795 = vmatpush1.msra.mxu0 0.0
        %796 = vmatprep.subr.mxu0 0.0
        %797 = vmatpush1.msra.mxu0 0.0
        %798 = vmatprep.subr.mxu0 0.0
        %799 = vmatpush1.msra.mxu0 0.0
        %800 = vmatprep.subr.mxu0 0.0
        %801 = vmatpush1.msra.mxu0 0.0
        %802 = vmatprep.subr.mxu0 0.0
        %803 = vmatpush1.msra.mxu0 0.0
        %804 = vmatprep.subr.mxu0 0.0
        %805 = vmatpush1.msra.mxu0 %v467
        %806 = vmatprep.subr.mxu0 0.0
        %807 = vmatpush1.msra.mxu0 %v466
        %808 = vmatprep.subr.mxu0 0.0
        %809 = vmatpush1.msra.mxu0 %v465
        %810 = vmatprep.subr.mxu0 0.0
        %811 = vmatpush1.msra.mxu0 %v464
        %812 = vmatprep.subr.mxu0 0.0
        %813 = vmatpush2.msra.mxu0 0.0
        %814 = vmatprep.subr.mxu0 0.0
        %815 = vmatpush2.msra.mxu0 0.0
        %816 = vmatprep.subr.mxu0 0.0
        %817 = vmatpush2.msra.mxu0 0.0
        %818 = vmatprep.subr.mxu0 0.0
        %819 = vmatpush2.msra.mxu0 0.0
        %820 = vmatprep.subr.mxu0 0.0
        %821 = vmatpush2.msra.mxu0 0.0
        %822 = vmatprep.subr.mxu0 0.0
        %823 = vmatpush2.msra.mxu0 0.0
        %824 = vmatprep.subr.mxu0 0.0
        %825 = vmatpush2.msra.mxu0 0.0
        %826 = vmatprep.subr.mxu0 0.0
        %827 = vmatpush2.msra.mxu0 0.0
        %828 = vmatprep.subr.mxu0 0.0
        %829 = vmatpush2.msra.mxu0 0.0
        %830 = vmatprep.subr.mxu0 0.0
        %831 = vmatpush2.msra.mxu0 0.0
        %832 = vmatprep.subr.mxu0 0.0
        %833 = vmatpush2.msra.mxu0 0.0
        %834 = vmatprep.subr.mxu0 0.0
        %835 = vmatpush2.msra.mxu0 0.0
        %836 = vmatprep.subr.mxu0 0.0
        %837 = vmatpush2.msra.mxu0 0.0
        %838 = vmatprep.subr.mxu0 0.0
        %839 = vmatpush2.msra.mxu0 0.0
        %840 = vmatprep.subr.mxu0 0.0
        %841 = vmatpush2.msra.mxu0 0.0
        %842 = vmatprep.subr.mxu0 0.0
        %843 = vmatpush2.msra.mxu0 0.0
        %844 = vmatprep.mubr.f32.mxu0 0.0
        %845 = vmatmul.mubr.f32.gmra.mxu0 %v778
        %v846 = vpop.f32.mrf.mxu0
        %v847 = vadd.f32 0.0, %v846
        %v848 = vpop.f32.mrf.mxu0
        %849 = vdwg.mxu0
        %v851 = vrot.slane %v847, 6
        %v852 = vrot.slane %v847, 7
        %v855 = vadd.f32 %v456, %v851
        %v856 = vadd.f32 %v461, %v852
        %v857 = vxor.u32 %v855, 2147483648
        %v858 = vxor.u32 %v856, 2147483648
        %v859 = vmul.f32 %v857, 1.442695
        %v860 = vpow.pop %v859
        %v861 = vmul.f32 %v858, 1.442695
        %v862 = vpow.pop %v861
        %v863 = vadd.f32 %v860, 1.0
        %v864 = vadd.f32 %v862, 1.0
        %v865 = vrcp.pop %v863
        %v866 = vmul.f32 1.0, %v865
        %v867 = vrcp.pop %v864
        %v868 = vmul.f32 1.0, %v867
        %v869 = vadd.f32 %v847, %v567
        %v871 = vrot.slane %v869, 6
        %v872 = vrot.slane %v869, 7
        %873 = vrot.lane.b32.xlu0 %v871, 64
        %v874 = vpop.permute.xlu0 %873
        %875 = vrot.lane.b32.xlu0 %v872, 64
        %v876 = vpop.permute.xlu0 %875
        %v879 = vmul.f32 %v866, %v874
        %v880 = vmul.f32 %v868, %v876
        %883 = vrot.lane.b32.xlu0 %v879, 64
        %v884 = vpop.permute.xlu0 %883
        %885 = vrot.lane.b32.xlu0 %v880, 64
        %v886 = vpop.permute.xlu0 %885
        %v889 = vadd.f32 %v456, %v884
        %v890 = vadd.f32 %v461, %v886
        %v891 = vtanh.pop %v889
        %v892 = vtanh.pop %v890
        %v893 = vsub.f32 1.0, %v866
        %v894 = vsub.f32 1.0, %v868
        %897 = vrot.lane.b32.xlu0 %v891, 96
        %v898 = vpop.permute.xlu0 %897
        %899 = vrot.lane.b32.xlu0 %v892, 96
        %v900 = vpop.permute.xlu0 %899
        %v903 = vmul.f32 %v893, %v898
        %v904 = vmul.f32 %v894, %v900
        %v905 = vrot.slane %v761, 7
        %v906 = vrot.slane %v762, 7
        %v909 = vmul.f32 %v866, %v905
        %v910 = vmul.f32 %v868, %v906
        %v911 = vadd.f32 %v903, %v909
        %v912 = vadd.f32 %v904, %v910
        %915 = vrot.lane.b32.xlu0 %v911, 96
        %v916 = vpop.permute.xlu0 %915
        %917 = vrot.lane.b32.xlu0 %v912, 96
        %v918 = vpop.permute.xlu0 %917
        %vm921 = vcmask 256002
        %922 = vst.msk [vmem:[#allocation3] sm:$0x4] %vm921, %v916
        %923 = vst.msk [vmem:[#allocation3 + $0x8] sm:$0x4] %vm921, %v918
        %v924 = vrot.slane %v911, 2
        %v925 = vrot.slane %v912, 1
        %v926 = vsel %vm627, %v925, %v924
        %927 = vrot.lane.b32.xlu0 %v926, 96
        %v928 = vpop.permute.xlu0 %927
        %v929 = vsel %vm382, %v928, 0
        %931 = vmatprep.subr.mxu0 0.0
        %932 = vmatpush1.msra.mxu0 0.0
        %933 = vmatprep.subr.mxu0 0.0
        %934 = vmatpush1.msra.mxu0 0.0
        %935 = vmatprep.subr.mxu0 0.0
        %936 = vmatpush1.msra.mxu0 0.0
        %937 = vmatprep.subr.mxu0 0.0
        %938 = vmatpush1.msra.mxu0 0.0
        %939 = vmatprep.subr.mxu0 0.0
        %940 = vmatpush1.msra.mxu0 0.0
        %941 = vmatprep.subr.mxu0 0.0
        %942 = vmatpush1.msra.mxu0 0.0
        %943 = vmatprep.subr.mxu0 0.0
        %944 = vmatpush1.msra.mxu0 0.0
        %945 = vmatprep.subr.mxu0 0.0
        %946 = vmatpush1.msra.mxu0 0.0
        %947 = vmatprep.subr.mxu0 0.0
        %948 = vmatpush1.msra.mxu0 0.0
        %949 = vmatprep.subr.mxu0 0.0
        %950 = vmatpush1.msra.mxu0 0.0
        %951 = vmatprep.subr.mxu0 0.0
        %952 = vmatpush1.msra.mxu0 0.0
        %953 = vmatprep.subr.mxu0 0.0
        %954 = vmatpush1.msra.mxu0 0.0
        %955 = vmatprep.subr.mxu0 0.0
        %956 = vmatpush1.msra.mxu0 %v467
        %957 = vmatprep.subr.mxu0 0.0
        %958 = vmatpush1.msra.mxu0 %v466
        %959 = vmatprep.subr.mxu0 0.0
        %960 = vmatpush1.msra.mxu0 %v465
        %961 = vmatprep.subr.mxu0 0.0
        %962 = vmatpush1.msra.mxu0 %v464
        %963 = vmatprep.subr.mxu0 0.0
        %964 = vmatpush2.msra.mxu0 0.0
        %965 = vmatprep.subr.mxu0 0.0
        %966 = vmatpush2.msra.mxu0 0.0
        %967 = vmatprep.subr.mxu0 0.0
        %968 = vmatpush2.msra.mxu0 0.0
        %969 = vmatprep.subr.mxu0 0.0
        %970 = vmatpush2.msra.mxu0 0.0
        %971 = vmatprep.subr.mxu0 0.0
        %972 = vmatpush2.msra.mxu0 0.0
        %973 = vmatprep.subr.mxu0 0.0
        %974 = vmatpush2.msra.mxu0 0.0
        %975 = vmatprep.subr.mxu0 0.0
        %976 = vmatpush2.msra.mxu0 0.0
        %977 = vmatprep.subr.mxu0 0.0
        %978 = vmatpush2.msra.mxu0 0.0
        %979 = vmatprep.subr.mxu0 0.0
        %980 = vmatpush2.msra.mxu0 0.0
        %981 = vmatprep.subr.mxu0 0.0
        %982 = vmatpush2.msra.mxu0 0.0
        %983 = vmatprep.subr.mxu0 0.0
        %984 = vmatpush2.msra.mxu0 0.0
        %985 = vmatprep.subr.mxu0 0.0
        %986 = vmatpush2.msra.mxu0 0.0
        %987 = vmatprep.subr.mxu0 0.0
        %988 = vmatpush2.msra.mxu0 0.0
        %989 = vmatprep.subr.mxu0 0.0
        %990 = vmatpush2.msra.mxu0 0.0
        %991 = vmatprep.subr.mxu0 0.0
        %992 = vmatpush2.msra.mxu0 0.0
        %993 = vmatprep.subr.mxu0 0.0
        %994 = vmatpush2.msra.mxu0 0.0
        %995 = vmatprep.mubr.f32.mxu0 0.0
        %996 = vmatmul.mubr.f32.gmra.mxu0 %v929
        %v997 = vpop.f32.mrf.mxu0
        %v998 = vadd.f32 0.0, %v997
        %v999 = vpop.f32.mrf.mxu0
        %1000 = vdwg.mxu0
        %v1002 = vrot.slane %v998, 5
        %v1003 = vrot.slane %v998, 6
        %v1006 = vadd.f32 %v456, %v1002
        %v1007 = vadd.f32 %v461, %v1003
        %v1008 = vxor.u32 %v1006, 2147483648
        %v1009 = vxor.u32 %v1007, 2147483648
        %v1010 = vmul.f32 %v1008, 1.442695
        %v1011 = vpow.pop %v1010
        %v1012 = vmul.f32 %v1009, 1.442695
        %v1013 = vpow.pop %v1012
        %v1014 = vadd.f32 %v1011, 1.0
        %v1015 = vadd.f32 %v1013, 1.0
        %v1016 = vrcp.pop %v1014
        %v1017 = vmul.f32 1.0, %v1016
        %v1018 = vrcp.pop %v1015
        %v1019 = vmul.f32 1.0, %v1018
        %v1020 = vadd.f32 %v998, %v567
        %v1022 = vrot.slane %v1020, 5
        %v1023 = vrot.slane %v1020, 6
        %1024 = vrot.lane.b32.xlu0 %v1022, 64
        %v1025 = vpop.permute.xlu0 %1024
        %1026 = vrot.lane.b32.xlu0 %v1023, 64
        %v1027 = vpop.permute.xlu0 %1026
        %v1030 = vmul.f32 %v1017, %v1025
        %v1031 = vmul.f32 %v1019, %v1027
        %1034 = vrot.lane.b32.xlu0 %v1030, 64
        %v1035 = vpop.permute.xlu0 %1034
        %1036 = vrot.lane.b32.xlu0 %v1031, 64
        %v1037 = vpop.permute.xlu0 %1036
        %v1040 = vadd.f32 %v456, %v1035
        %v1041 = vadd.f32 %v461, %v1037
        %v1042 = vtanh.pop %v1040
        %v1043 = vtanh.pop %v1041
        %v1044 = vsub.f32 1.0, %v1017
        %v1045 = vsub.f32 1.0, %v1019
        %1048 = vrot.lane.b32.xlu0 %v1042, 96
        %v1049 = vpop.permute.xlu0 %1048
        %1050 = vrot.lane.b32.xlu0 %v1043, 96
        %v1051 = vpop.permute.xlu0 %1050
        %v1054 = vmul.f32 %v1044, %v1049
        %v1055 = vmul.f32 %v1045, %v1051
        %v1056 = vrot.slane %v911, 7
        %v1057 = vrot.slane %v912, 7
        %v1060 = vmul.f32 %v1017, %v1056
        %v1061 = vmul.f32 %v1019, %v1057
        %v1062 = vadd.f32 %v1054, %v1060
        %v1063 = vadd.f32 %v1055, %v1061
        %1066 = vrot.lane.b32.xlu0 %v1062, 96
        %v1067 = vpop.permute.xlu0 %1066
        %1068 = vrot.lane.b32.xlu0 %v1063, 96
        %v1069 = vpop.permute.xlu0 %1068
        %vm1072 = vcmask 257027
        %1073 = vst.msk [vmem:[#allocation3] sm:$0x8] %vm1072, %v1067
        %1074 = vst.msk [vmem:[#allocation3 + $0x8] sm:$0x8] %vm1072, %v1069
        %v1075 = vrot.slane %v1062, 3
        %v1076 = vrot.slane %v1063, 2
        %v1077 = vsel %vm627, %v1076, %v1075
        %1078 = vrot.lane.b32.xlu0 %v1077, 96
        %v1079 = vpop.permute.xlu0 %1078
        %v1080 = vsel %vm382, %v1079, 0
        %1082 = vmatprep.subr.mxu0 0.0
        %1083 = vmatpush1.msra.mxu0 0.0
        %1084 = vmatprep.subr.mxu0 0.0
        %1085 = vmatpush1.msra.mxu0 0.0
        %1086 = vmatprep.subr.mxu0 0.0
        %1087 = vmatpush1.msra.mxu0 0.0
        %1088 = vmatprep.subr.mxu0 0.0
        %1089 = vmatpush1.msra.mxu0 0.0
        %1090 = vmatprep.subr.mxu0 0.0
        %1091 = vmatpush1.msra.mxu0 0.0
        %1092 = vmatprep.subr.mxu0 0.0
        %1093 = vmatpush1.msra.mxu0 0.0
        %1094 = vmatprep.subr.mxu0 0.0
        %1095 = vmatpush1.msra.mxu0 0.0
        %1096 = vmatprep.subr.mxu0 0.0
        %1097 = vmatpush1.msra.mxu0 0.0
        %1098 = vmatprep.subr.mxu0 0.0
        %1099 = vmatpush1.msra.mxu0 0.0
        %1100 = vmatprep.subr.mxu0 0.0
        %1101 = vmatpush1.msra.mxu0 0.0
        %1102 = vmatprep.subr.mxu0 0.0
        %1103 = vmatpush1.msra.mxu0 0.0
        %1104 = vmatprep.subr.mxu0 0.0
        %1105 = vmatpush1.msra.mxu0 0.0
        %1106 = vmatprep.subr.mxu0 0.0
        %1107 = vmatpush1.msra.mxu0 %v467
        %1108 = vmatprep.subr.mxu0 0.0
        %1109 = vmatpush1.msra.mxu0 %v466
        %1110 = vmatprep.subr.mxu0 0.0
        %1111 = vmatpush1.msra.mxu0 %v465
        %1112 = vmatprep.subr.mxu0 0.0
        %1113 = vmatpush1.msra.mxu0 %v464
        %1114 = vmatprep.subr.mxu0 0.0
        %1115 = vmatpush2.msra.mxu0 0.0
        %1116 = vmatprep.subr.mxu0 0.0
        %1117 = vmatpush2.msra.mxu0 0.0
        %1118 = vmatprep.subr.mxu0 0.0
        %1119 = vmatpush2.msra.mxu0 0.0
        %1120 = vmatprep.subr.mxu0 0.0
        %1121 = vmatpush2.msra.mxu0 0.0
        %1122 = vmatprep.subr.mxu0 0.0
        %1123 = vmatpush2.msra.mxu0 0.0
        %1124 = vmatprep.subr.mxu0 0.0
        %1125 = vmatpush2.msra.mxu0 0.0
        %1126 = vmatprep.subr.mxu0 0.0
        %1127 = vmatpush2.msra.mxu0 0.0
        %1128 = vmatprep.subr.mxu0 0.0
        %1129 = vmatpush2.msra.mxu0 0.0
        %1130 = vmatprep.subr.mxu0 0.0
        %1131 = vmatpush2.msra.mxu0 0.0
        %1132 = vmatprep.subr.mxu0 0.0
        %1133 = vmatpush2.msra.mxu0 0.0
        %1134 = vmatprep.subr.mxu0 0.0
        %1135 = vmatpush2.msra.mxu0 0.0
        %1136 = vmatprep.subr.mxu0 0.0
        %1137 = vmatpush2.msra.mxu0 0.0
        %1138 = vmatprep.subr.mxu0 0.0
        %1139 = vmatpush2.msra.mxu0 0.0
        %1140 = vmatprep.subr.mxu0 0.0
        %1141 = vmatpush2.msra.mxu0 0.0
        %1142 = vmatprep.subr.mxu0 0.0
        %1143 = vmatpush2.msra.mxu0 0.0
        %1144 = vmatprep.subr.mxu0 0.0
        %1145 = vmatpush2.msra.mxu0 0.0
        %1146 = vmatprep.mubr.f32.mxu0 0.0
        %1147 = vmatmul.mubr.f32.gmra.mxu0 %v1080
        %v1148 = vpop.f32.mrf.mxu0
        %v1149 = vadd.f32 0.0, %v1148
        %v1150 = vpop.f32.mrf.mxu0
        %1151 = vdwg.mxu0
        %v1153 = vrot.slane %v1149, 4
        %v1154 = vrot.slane %v1149, 5
        %v1157 = vadd.f32 %v456, %v1153
        %v1158 = vadd.f32 %v461, %v1154
        %v1159 = vxor.u32 %v1157, 2147483648
        %v1160 = vxor.u32 %v1158, 2147483648
        %v1161 = vmul.f32 %v1159, 1.442695
        %v1162 = vpow.pop %v1161
        %v1163 = vmul.f32 %v1160, 1.442695
        %v1164 = vpow.pop %v1163
        %v1165 = vadd.f32 %v1162, 1.0
        %v1166 = vadd.f32 %v1164, 1.0
        %v1167 = vrcp.pop %v1165
        %v1168 = vmul.f32 1.0, %v1167
        %v1169 = vrcp.pop %v1166
        %v1170 = vmul.f32 1.0, %v1169
        %v1171 = vadd.f32 %v1149, %v567
        %v1173 = vrot.slane %v1171, 4
        %v1174 = vrot.slane %v1171, 5
        %1175 = vrot.lane.b32.xlu0 %v1173, 64
        %v1176 = vpop.permute.xlu0 %1175
        %1177 = vrot.lane.b32.xlu0 %v1174, 64
        %v1178 = vpop.permute.xlu0 %1177
        %v1181 = vmul.f32 %v1168, %v1176
        %v1182 = vmul.f32 %v1170, %v1178
        %1185 = vrot.lane.b32.xlu0 %v1181, 64
        %v1186 = vpop.permute.xlu0 %1185
        %1187 = vrot.lane.b32.xlu0 %v1182, 64
        %v1188 = vpop.permute.xlu0 %1187
        %v1191 = vadd.f32 %v456, %v1186
        %v1192 = vadd.f32 %v461, %v1188
        %v1193 = vtanh.pop %v1191
        %v1194 = vtanh.pop %v1192
        %v1195 = vsub.f32 1.0, %v1168
        %v1196 = vsub.f32 1.0, %v1170
        %1199 = vrot.lane.b32.xlu0 %v1193, 96
        %v1200 = vpop.permute.xlu0 %1199
        %1201 = vrot.lane.b32.xlu0 %v1194, 96
        %v1202 = vpop.permute.xlu0 %1201
        %v1205 = vmul.f32 %v1195, %v1200
        %v1206 = vmul.f32 %v1196, %v1202
        %v1207 = vrot.slane %v1062, 7
        %v1208 = vrot.slane %v1063, 7
        %v1211 = vmul.f32 %v1168, %v1207
        %v1212 = vmul.f32 %v1170, %v1208
        %v1213 = vadd.f32 %v1205, %v1211
        %v1214 = vadd.f32 %v1206, %v1212
        %1217 = vrot.lane.b32.xlu0 %v1213, 96
        %v1218 = vpop.permute.xlu0 %1217
        %1219 = vrot.lane.b32.xlu0 %v1214, 96
        %v1220 = vpop.permute.xlu0 %1219
        %vm1223 = vcmask 258052
        %1224 = vst.msk [vmem:[#allocation3] sm:$0x10] %vm1223, %v1218
        %1225 = vst.msk [vmem:[#allocation3 + $0x8] sm:$0x10] %vm1223, %v1220
        %v1226 = vrot.slane %v1213, 4
        %v1227 = vrot.slane %v1214, 3
        %v1228 = vsel %vm627, %v1227, %v1226
        %1229 = vrot.lane.b32.xlu0 %v1228, 96
        %v1230 = vpop.permute.xlu0 %1229
        %v1231 = vsel %vm382, %v1230, 0
        %1233 = vmatprep.subr.mxu0 0.0
        %1234 = vmatpush1.msra.mxu0 0.0
        %1235 = vmatprep.subr.mxu0 0.0
        %1236 = vmatpush1.msra.mxu0 0.0
        %1237 = vmatprep.subr.mxu0 0.0
        %1238 = vmatpush1.msra.mxu0 0.0
        %1239 = vmatprep.subr.mxu0 0.0
        %1240 = vmatpush1.msra.mxu0 0.0
        %1241 = vmatprep.subr.mxu0 0.0
        %1242 = vmatpush1.msra.mxu0 0.0
        %1243 = vmatprep.subr.mxu0 0.0
        %1244 = vmatpush1.msra.mxu0 0.0
        %1245 = vmatprep.subr.mxu0 0.0
        %1246 = vmatpush1.msra.mxu0 0.0
        %1247 = vmatprep.subr.mxu0 0.0
        %1248 = vmatpush1.msra.mxu0 0.0
        %1249 = vmatprep.subr.mxu0 0.0
        %1250 = vmatpush1.msra.mxu0 0.0
        %1251 = vmatprep.subr.mxu0 0.0
        %1252 = vmatpush1.msra.mxu0 0.0
        %1253 = vmatprep.subr.mxu0 0.0
        %1254 = vmatpush1.msra.mxu0 0.0
        %1255 = vmatprep.subr.mxu0 0.0
        %1256 = vmatpush1.msra.mxu0 0.0
        %1257 = vmatprep.subr.mxu0 0.0
        %1258 = vmatpush1.msra.mxu0 %v467
        %1259 = vmatprep.subr.mxu0 0.0
        %1260 = vmatpush1.msra.mxu0 %v466
        %1261 = vmatprep.subr.mxu0 0.0
        %1262 = vmatpush1.msra.mxu0 %v465
        %1263 = vmatprep.subr.mxu0 0.0
        %1264 = vmatpush1.msra.mxu0 %v464
        %1265 = vmatprep.subr.mxu0 0.0
        %1266 = vmatpush2.msra.mxu0 0.0
        %1267 = vmatprep.subr.mxu0 0.0
        %1268 = vmatpush2.msra.mxu0 0.0
        %1269 = vmatprep.subr.mxu0 0.0
        %1270 = vmatpush2.msra.mxu0 0.0
        %1271 = vmatprep.subr.mxu0 0.0
        %1272 = vmatpush2.msra.mxu0 0.0
        %1273 = vmatprep.subr.mxu0 0.0
        %1274 = vmatpush2.msra.mxu0 0.0
        %1275 = vmatprep.subr.mxu0 0.0
        %1276 = vmatpush2.msra.mxu0 0.0
        %1277 = vmatprep.subr.mxu0 0.0
        %1278 = vmatpush2.msra.mxu0 0.0
        %1279 = vmatprep.subr.mxu0 0.0
        %1280 = vmatpush2.msra.mxu0 0.0
        %1281 = vmatprep.subr.mxu0 0.0
        %1282 = vmatpush2.msra.mxu0 0.0
        %1283 = vmatprep.subr.mxu0 0.0
        %1284 = vmatpush2.msra.mxu0 0.0
        %1285 = vmatprep.subr.mxu0 0.0
        %1286 = vmatpush2.msra.mxu0 0.0
        %1287 = vmatprep.subr.mxu0 0.0
        %1288 = vmatpush2.msra.mxu0 0.0
        %1289 = vmatprep.subr.mxu0 0.0
        %1290 = vmatpush2.msra.mxu0 0.0
        %1291 = vmatprep.subr.mxu0 0.0
        %1292 = vmatpush2.msra.mxu0 0.0
        %1293 = vmatprep.subr.mxu0 0.0
        %1294 = vmatpush2.msra.mxu0 0.0
        %1295 = vmatprep.subr.mxu0 0.0
        %1296 = vmatpush2.msra.mxu0 0.0
        %1297 = vmatprep.mubr.f32.mxu0 0.0
        %1298 = vmatmul.mubr.f32.gmra.mxu0 %v1231
        %v1299 = vpop.f32.mrf.mxu0
        %v1300 = vadd.f32 0.0, %v1299
        %v1301 = vpop.f32.mrf.mxu0
        %1302 = vdwg.mxu0
        %v1304 = vrot.slane %v1300, 3
        %v1305 = vrot.slane %v1300, 4
        %v1308 = vadd.f32 %v456, %v1304
        %v1309 = vadd.f32 %v461, %v1305
        %v1310 = vxor.u32 %v1308, 2147483648
        %v1311 = vxor.u32 %v1309, 2147483648
        %v1312 = vmul.f32 %v1310, 1.442695
        %v1313 = vpow.pop %v1312
        %v1314 = vmul.f32 %v1311, 1.442695
        %v1315 = vpow.pop %v1314
        %v1316 = vadd.f32 %v1313, 1.0
        %v1317 = vadd.f32 %v1315, 1.0
        %v1318 = vrcp.pop %v1316
        %v1319 = vmul.f32 1.0, %v1318
        %v1320 = vrcp.pop %v1317
        %v1321 = vmul.f32 1.0, %v1320
        %v1322 = vadd.f32 %v1300, %v567
        %v1324 = vrot.slane %v1322, 3
        %v1325 = vrot.slane %v1322, 4
        %1326 = vrot.lane.b32.xlu0 %v1324, 64
        %v1327 = vpop.permute.xlu0 %1326
        %1328 = vrot.lane.b32.xlu0 %v1325, 64
        %v1329 = vpop.permute.xlu0 %1328
        %v1332 = vmul.f32 %v1319, %v1327
        %v1333 = vmul.f32 %v1321, %v1329
        %1336 = vrot.lane.b32.xlu0 %v1332, 64
        %v1337 = vpop.permute.xlu0 %1336
        %1338 = vrot.lane.b32.xlu0 %v1333, 64
        %v1339 = vpop.permute.xlu0 %1338
        %v1342 = vadd.f32 %v456, %v1337
        %v1343 = vadd.f32 %v461, %v1339
        %v1344 = vtanh.pop %v1342
        %v1345 = vtanh.pop %v1343
        %v1346 = vsub.f32 1.0, %v1319
        %v1347 = vsub.f32 1.0, %v1321
        %1350 = vrot.lane.b32.xlu0 %v1344, 96
        %v1351 = vpop.permute.xlu0 %1350
        %1352 = vrot.lane.b32.xlu0 %v1345, 96
        %v1353 = vpop.permute.xlu0 %1352
        %v1356 = vmul.f32 %v1346, %v1351
        %v1357 = vmul.f32 %v1347, %v1353
        %v1358 = vrot.slane %v1213, 7
        %v1359 = vrot.slane %v1214, 7
        %v1362 = vmul.f32 %v1319, %v1358
        %v1363 = vmul.f32 %v1321, %v1359
        %v1364 = vadd.f32 %v1356, %v1362
        %v1365 = vadd.f32 %v1357, %v1363
        %1368 = vrot.lane.b32.xlu0 %v1364, 96
        %v1369 = vpop.permute.xlu0 %1368
        %1370 = vrot.lane.b32.xlu0 %v1365, 96
        %v1371 = vpop.permute.xlu0 %1370
        %vm1374 = vcmask 259077
        %1375 = vst.msk [vmem:[#allocation3] sm:$0x20] %vm1374, %v1369
        %1376 = vst.msk [vmem:[#allocation3 + $0x8] sm:$0x20] %vm1374, %v1371
        %v1377 = vrot.slane %v1364, 5
        %v1378 = vrot.slane %v1365, 4
        %v1379 = vsel %vm627, %v1378, %v1377
        %1380 = vrot.lane.b32.xlu0 %v1379, 96
        %v1381 = vpop.permute.xlu0 %1380
        %v1382 = vsel %vm382, %v1381, 0
        %1384 = vmatprep.subr.mxu0 0.0
        %1385 = vmatpush1.msra.mxu0 0.0
        %1386 = vmatprep.subr.mxu0 0.0
        %1387 = vmatpush1.msra.mxu0 0.0
        %1388 = vmatprep.subr.mxu0 0.0
        %1389 = vmatpush1.msra.mxu0 0.0
        %1390 = vmatprep.subr.mxu0 0.0
        %1391 = vmatpush1.msra.mxu0 0.0
        %1392 = vmatprep.subr.mxu0 0.0
        %1393 = vmatpush1.msra.mxu0 0.0
        %1394 = vmatprep.subr.mxu0 0.0
        %1395 = vmatpush1.msra.mxu0 0.0
        %1396 = vmatprep.subr.mxu0 0.0
        %1397 = vmatpush1.msra.mxu0 0.0
        %1398 = vmatprep.subr.mxu0 0.0
        %1399 = vmatpush1.msra.mxu0 0.0
        %1400 = vmatprep.subr.mxu0 0.0
        %1401 = vmatpush1.msra.mxu0 0.0
        %1402 = vmatprep.subr.mxu0 0.0
        %1403 = vmatpush1.msra.mxu0 0.0
        %1404 = vmatprep.subr.mxu0 0.0
        %1405 = vmatpush1.msra.mxu0 0.0
        %1406 = vmatprep.subr.mxu0 0.0
        %1407 = vmatpush1.msra.mxu0 0.0
        %1408 = vmatprep.subr.mxu0 0.0
        %1409 = vmatpush1.msra.mxu0 %v467
        %1410 = vmatprep.subr.mxu0 0.0
        %1411 = vmatpush1.msra.mxu0 %v466
        %1412 = vmatprep.subr.mxu0 0.0
        %1413 = vmatpush1.msra.mxu0 %v465
        %1414 = vmatprep.subr.mxu0 0.0
        %1415 = vmatpush1.msra.mxu0 %v464
        %1416 = vmatprep.subr.mxu0 0.0
        %1417 = vmatpush2.msra.mxu0 0.0
        %1418 = vmatprep.subr.mxu0 0.0
        %1419 = vmatpush2.msra.mxu0 0.0
        %1420 = vmatprep.subr.mxu0 0.0
        %1421 = vmatpush2.msra.mxu0 0.0
        %1422 = vmatprep.subr.mxu0 0.0
        %1423 = vmatpush2.msra.mxu0 0.0
        %1424 = vmatprep.subr.mxu0 0.0
        %1425 = vmatpush2.msra.mxu0 0.0
        %1426 = vmatprep.subr.mxu0 0.0
        %1427 = vmatpush2.msra.mxu0 0.0
        %1428 = vmatprep.subr.mxu0 0.0
        %1429 = vmatpush2.msra.mxu0 0.0
        %1430 = vmatprep.subr.mxu0 0.0
        %1431 = vmatpush2.msra.mxu0 0.0
        %1432 = vmatprep.subr.mxu0 0.0
        %1433 = vmatpush2.msra.mxu0 0.0
        %1434 = vmatprep.subr.mxu0 0.0
        %1435 = vmatpush2.msra.mxu0 0.0
        %1436 = vmatprep.subr.mxu0 0.0
        %1437 = vmatpush2.msra.mxu0 0.0
        %1438 = vmatprep.subr.mxu0 0.0
        %1439 = vmatpush2.msra.mxu0 0.0
        %1440 = vmatprep.subr.mxu0 0.0
        %1441 = vmatpush2.msra.mxu0 0.0
        %1442 = vmatprep.subr.mxu0 0.0
        %1443 = vmatpush2.msra.mxu0 0.0
        %1444 = vmatprep.subr.mxu0 0.0
        %1445 = vmatpush2.msra.mxu0 0.0
        %1446 = vmatprep.subr.mxu0 0.0
        %1447 = vmatpush2.msra.mxu0 0.0
        %1448 = vmatprep.mubr.f32.mxu0 0.0
        %1449 = vmatmul.mubr.f32.gmra.mxu0 %v1382
        %v1450 = vpop.f32.mrf.mxu0
        %v1451 = vadd.f32 0.0, %v1450
        %v1452 = vpop.f32.mrf.mxu0
        %1453 = vdwg.mxu0
        %v1455 = vrot.slane %v1451, 2
        %v1456 = vrot.slane %v1451, 3
        %v1459 = vadd.f32 %v456, %v1455
        %v1460 = vadd.f32 %v461, %v1456
        %v1461 = vxor.u32 %v1459, 2147483648
        %v1462 = vxor.u32 %v1460, 2147483648
        %v1463 = vmul.f32 %v1461, 1.442695
        %v1464 = vpow.pop %v1463
        %v1465 = vmul.f32 %v1462, 1.442695
        %v1466 = vpow.pop %v1465
        %v1467 = vadd.f32 %v1464, 1.0
        %v1468 = vadd.f32 %v1466, 1.0
        %v1469 = vrcp.pop %v1467
        %v1470 = vmul.f32 1.0, %v1469
        %v1471 = vrcp.pop %v1468
        %v1472 = vmul.f32 1.0, %v1471
        %v1473 = vadd.f32 %v1451, %v567
        %v1475 = vrot.slane %v1473, 2
        %v1476 = vrot.slane %v1473, 3
        %1477 = vrot.lane.b32.xlu0 %v1475, 64
        %v1478 = vpop.permute.xlu0 %1477
        %1479 = vrot.lane.b32.xlu0 %v1476, 64
        %v1480 = vpop.permute.xlu0 %1479
        %v1483 = vmul.f32 %v1470, %v1478
        %v1484 = vmul.f32 %v1472, %v1480
        %1487 = vrot.lane.b32.xlu0 %v1483, 64
        %v1488 = vpop.permute.xlu0 %1487
        %1489 = vrot.lane.b32.xlu0 %v1484, 64
        %v1490 = vpop.permute.xlu0 %1489
        %v1493 = vadd.f32 %v456, %v1488
        %v1494 = vadd.f32 %v461, %v1490
        %v1495 = vtanh.pop %v1493
        %v1496 = vtanh.pop %v1494
        %v1497 = vsub.f32 1.0, %v1470
        %v1498 = vsub.f32 1.0, %v1472
        %1501 = vrot.lane.b32.xlu0 %v1495, 96
        %v1502 = vpop.permute.xlu0 %1501
        %1503 = vrot.lane.b32.xlu0 %v1496, 96
        %v1504 = vpop.permute.xlu0 %1503
        %v1507 = vmul.f32 %v1497, %v1502
        %v1508 = vmul.f32 %v1498, %v1504
        %v1509 = vrot.slane %v1364, 7
        %v1510 = vrot.slane %v1365, 7
        %v1513 = vmul.f32 %v1470, %v1509
        %v1514 = vmul.f32 %v1472, %v1510
        %v1515 = vadd.f32 %v1507, %v1513
        %v1516 = vadd.f32 %v1508, %v1514
        %1519 = vrot.lane.b32.xlu0 %v1515, 96
        %v1520 = vpop.permute.xlu0 %1519
        %1521 = vrot.lane.b32.xlu0 %v1516, 96
        %v1522 = vpop.permute.xlu0 %1521
        %vm1525 = vcmask 260102
        %1526 = vst.msk [vmem:[#allocation3] sm:$0x40] %vm1525, %v1520
        %1527 = vst.msk [vmem:[#allocation3 + $0x8] sm:$0x40] %vm1525, %v1522
        %v1528 = vrot.slane %v1515, 6
        %v1529 = vrot.slane %v1516, 5
        %v1530 = vsel %vm627, %v1529, %v1528
        %1531 = vrot.lane.b32.xlu0 %v1530, 96
        %v1532 = vpop.permute.xlu0 %1531
        %v1533 = vsel %vm382, %v1532, 0
        %1535 = vmatprep.subr.mxu0 0.0
        %1536 = vmatpush1.msra.mxu0 0.0
        %1537 = vmatprep.subr.mxu0 0.0
        %1538 = vmatpush1.msra.mxu0 0.0
        %1539 = vmatprep.subr.mxu0 0.0
        %1540 = vmatpush1.msra.mxu0 0.0
        %1541 = vmatprep.subr.mxu0 0.0
        %1542 = vmatpush1.msra.mxu0 0.0
        %1543 = vmatprep.subr.mxu0 0.0
        %1544 = vmatpush1.msra.mxu0 0.0
        %1545 = vmatprep.subr.mxu0 0.0
        %1546 = vmatpush1.msra.mxu0 0.0
        %1547 = vmatprep.subr.mxu0 0.0
        %1548 = vmatpush1.msra.mxu0 0.0
        %1549 = vmatprep.subr.mxu0 0.0
        %1550 = vmatpush1.msra.mxu0 0.0
        %1551 = vmatprep.subr.mxu0 0.0
        %1552 = vmatpush1.msra.mxu0 0.0
        %1553 = vmatprep.subr.mxu0 0.0
        %1554 = vmatpush1.msra.mxu0 0.0
        %1555 = vmatprep.subr.mxu0 0.0
        %1556 = vmatpush1.msra.mxu0 0.0
        %1557 = vmatprep.subr.mxu0 0.0
        %1558 = vmatpush1.msra.mxu0 0.0
        %1559 = vmatprep.subr.mxu0 0.0
        %1560 = vmatpush1.msra.mxu0 %v467
        %1561 = vmatprep.subr.mxu0 0.0
        %1562 = vmatpush1.msra.mxu0 %v466
        %1563 = vmatprep.subr.mxu0 0.0
        %1564 = vmatpush1.msra.mxu0 %v465
        %1565 = vmatprep.subr.mxu0 0.0
        %1566 = vmatpush1.msra.mxu0 %v464
        %1567 = vmatprep.subr.mxu0 0.0
        %1568 = vmatpush2.msra.mxu0 0.0
        %1569 = vmatprep.subr.mxu0 0.0
        %1570 = vmatpush2.msra.mxu0 0.0
        %1571 = vmatprep.subr.mxu0 0.0
        %1572 = vmatpush2.msra.mxu0 0.0
        %1573 = vmatprep.subr.mxu0 0.0
        %1574 = vmatpush2.msra.mxu0 0.0
        %1575 = vmatprep.subr.mxu0 0.0
        %1576 = vmatpush2.msra.mxu0 0.0
        %1577 = vmatprep.subr.mxu0 0.0
        %1578 = vmatpush2.msra.mxu0 0.0
        %1579 = vmatprep.subr.mxu0 0.0
        %1580 = vmatpush2.msra.mxu0 0.0
        %1581 = vmatprep.subr.mxu0 0.0
        %1582 = vmatpush2.msra.mxu0 0.0
        %1583 = vmatprep.subr.mxu0 0.0
        %1584 = vmatpush2.msra.mxu0 0.0
        %1585 = vmatprep.subr.mxu0 0.0
        %1586 = vmatpush2.msra.mxu0 0.0
        %1587 = vmatprep.subr.mxu0 0.0
        %1588 = vmatpush2.msra.mxu0 0.0
        %1589 = vmatprep.subr.mxu0 0.0
        %1590 = vmatpush2.msra.mxu0 0.0
        %1591 = vmatprep.subr.mxu0 0.0
        %1592 = vmatpush2.msra.mxu0 0.0
        %1593 = vmatprep.subr.mxu0 0.0
        %1594 = vmatpush2.msra.mxu0 0.0
        %1595 = vmatprep.subr.mxu0 0.0
        %1596 = vmatpush2.msra.mxu0 0.0
        %1597 = vmatprep.subr.mxu0 0.0
        %1598 = vmatpush2.msra.mxu0 0.0
        %1599 = vmatprep.mubr.f32.mxu0 0.0
        %1600 = vmatmul.mubr.f32.gmra.mxu0 %v1533
        %v1601 = vpop.f32.mrf.mxu0
        %v1602 = vadd.f32 0.0, %v1601
        %v1603 = vpop.f32.mrf.mxu0
        %1604 = vdwg.mxu0
        %v1606 = vrot.slane %v1602, 1
        %v1607 = vrot.slane %v1602, 2
        %v1610 = vadd.f32 %v456, %v1606
        %v1611 = vadd.f32 %v461, %v1607
        %v1612 = vxor.u32 %v1610, 2147483648
        %v1613 = vxor.u32 %v1611, 2147483648
        %v1614 = vmul.f32 %v1612, 1.442695
        %v1615 = vpow.pop %v1614
        %v1616 = vmul.f32 %v1613, 1.442695
        %v1617 = vpow.pop %v1616
        %v1618 = vadd.f32 %v1615, 1.0
        %v1619 = vadd.f32 %v1617, 1.0
        %v1620 = vrcp.pop %v1618
        %v1621 = vmul.f32 1.0, %v1620
        %v1622 = vrcp.pop %v1619
        %v1623 = vmul.f32 1.0, %v1622
        %v1624 = vadd.f32 %v1602, %v567
        %v1626 = vrot.slane %v1624, 1
        %v1627 = vrot.slane %v1624, 2
        %1628 = vrot.lane.b32.xlu0 %v1626, 64
        %v1629 = vpop.permute.xlu0 %1628
        %1630 = vrot.lane.b32.xlu0 %v1627, 64
        %v1631 = vpop.permute.xlu0 %1630
        %v1634 = vmul.f32 %v1621, %v1629
        %v1635 = vmul.f32 %v1623, %v1631
        %1638 = vrot.lane.b32.xlu0 %v1634, 64
        %v1639 = vpop.permute.xlu0 %1638
        %1640 = vrot.lane.b32.xlu0 %v1635, 64
        %v1641 = vpop.permute.xlu0 %1640
        %v1644 = vadd.f32 %v456, %v1639
        %v1645 = vadd.f32 %v461, %v1641
        %v1646 = vtanh.pop %v1644
        %v1647 = vtanh.pop %v1645
        %v1648 = vsub.f32 1.0, %v1621
        %v1649 = vsub.f32 1.0, %v1623
        %1652 = vrot.lane.b32.xlu0 %v1646, 96
        %v1653 = vpop.permute.xlu0 %1652
        %1654 = vrot.lane.b32.xlu0 %v1647, 96
        %v1655 = vpop.permute.xlu0 %1654
        %v1658 = vmul.f32 %v1648, %v1653
        %v1659 = vmul.f32 %v1649, %v1655
        %v1660 = vrot.slane %v1515, 7
        %v1661 = vrot.slane %v1516, 7
        %v1664 = vmul.f32 %v1621, %v1660
        %v1665 = vmul.f32 %v1623, %v1661
        %v1666 = vadd.f32 %v1658, %v1664
        %v1667 = vadd.f32 %v1659, %v1665
        %1670 = vrot.lane.b32.xlu0 %v1666, 96
        %v1671 = vpop.permute.xlu0 %1670
        %1672 = vrot.lane.b32.xlu0 %v1667, 96
        %v1673 = vpop.permute.xlu0 %1672
        %vm1676 = vcmask 261127
        %1677 = vst.msk [vmem:[#allocation3] sm:$0x80] %vm1676, %v1671
        %1678 = vst.msk [vmem:[#allocation3 + $0x8] sm:$0x80] %vm1676, %v1673
        %v1679 = vrot.slane %v1667, 7
        %1680 = vrot.lane.b32.xlu0 %v1679, 96
        %v1681 = vpop.permute.xlu0 %1680
        %1683 = vst.msk [vmem:[#allocation2 - $0x7] sm:$0x80] %vm1676, %v1671
        %1684 = vst.msk [vmem:[#allocation2 + $0x1] sm:$0x1] %vm623, %v1681
        %v1685 = vld [vmem:[#allocation3] sm:$0xff]
        %v1686 = vld [vmem:[#allocation3 + $0x8] sm:$0xff]
        %v1687 = vld [vmem:[%s5] sm:$0xff]
        %v1688 = vld [vmem:[%s5 + $0x8] sm:$0xff]
        %v1689 = vld [vmem:[%s5 + $0x10] sm:$0xff]
        %v1690 = vld [vmem:[%s5 + $0x18] sm:$0xff]
        %v1691 = vld [vmem:[%s6] sm:$0x1]
        %v1693 = vlaneseq
        %v1694 = vshrl.u32 %v1693, 7
        %v1695 = vsub.s32 0, %v1694
        %v1696 = vrot.slane %v1691, %v1695
        %v1699 = vsel %vm382, %v1685, 0
        %v1702 = vsel %vm382, %v1686, 0
        %1704 = vmatprep.subr.mxu0 0.0
        %1705 = vmatpush1.msra.mxu0 0.0
        %1706 = vmatprep.subr.mxu0 0.0
        %1707 = vmatpush1.msra.mxu0 0.0
        %1708 = vmatprep.subr.mxu0 0.0
        %1709 = vmatpush1.msra.mxu0 0.0
        %1710 = vmatprep.subr.mxu0 0.0
        %1711 = vmatpush1.msra.mxu0 0.0
        %1712 = vmatprep.subr.mxu0 0.0
        %1713 = vmatpush1.msra.mxu0 0.0
        %1714 = vmatprep.subr.mxu0 0.0
        %1715 = vmatpush1.msra.mxu0 0.0
        %1716 = vmatprep.subr.mxu0 0.0
        %1717 = vmatpush1.msra.mxu0 0.0
        %1718 = vmatprep.subr.mxu0 0.0
        %1719 = vmatpush1.msra.mxu0 0.0
        %1720 = vmatprep.subr.mxu0 0.0
        %1721 = vmatpush1.msra.mxu0 0.0
        %1722 = vmatprep.subr.mxu0 0.0
        %1723 = vmatpush1.msra.mxu0 0.0
        %1724 = vmatprep.subr.mxu0 0.0
        %1725 = vmatpush1.msra.mxu0 0.0
        %1726 = vmatprep.subr.mxu0 0.0
        %1727 = vmatpush1.msra.mxu0 0.0
        %1728 = vmatprep.subr.mxu0 0.0
        %1729 = vmatpush1.msra.mxu0 %v1690
        %1730 = vmatprep.subr.mxu0 0.0
        %1731 = vmatpush1.msra.mxu0 %v1689
        %1732 = vmatprep.subr.mxu0 0.0
        %1733 = vmatpush1.msra.mxu0 %v1688
        %1734 = vmatprep.subr.mxu0 0.0
        %1735 = vmatpush1.msra.mxu0 %v1687
        %1736 = vmatprep.subr.mxu0 0.0
        %1737 = vmatpush2.msra.mxu0 0.0
        %1738 = vmatprep.subr.mxu0 0.0
        %1739 = vmatpush2.msra.mxu0 0.0
        %1740 = vmatprep.subr.mxu0 0.0
        %1741 = vmatpush2.msra.mxu0 0.0
        %1742 = vmatprep.subr.mxu0 0.0
        %1743 = vmatpush2.msra.mxu0 0.0
        %1744 = vmatprep.subr.mxu0 0.0
        %1745 = vmatpush2.msra.mxu0 0.0
        %1746 = vmatprep.subr.mxu0 0.0
        %1747 = vmatpush2.msra.mxu0 0.0
        %1748 = vmatprep.subr.mxu0 0.0
        %1749 = vmatpush2.msra.mxu0 0.0
        %1750 = vmatprep.subr.mxu0 0.0
        %1751 = vmatpush2.msra.mxu0 0.0
        %1752 = vmatprep.subr.mxu0 0.0
        %1753 = vmatpush2.msra.mxu0 0.0
        %1754 = vmatprep.subr.mxu0 0.0
        %1755 = vmatpush2.msra.mxu0 0.0
        %1756 = vmatprep.subr.mxu0 0.0
        %1757 = vmatpush2.msra.mxu0 0.0
        %1758 = vmatprep.subr.mxu0 0.0
        %1759 = vmatpush2.msra.mxu0 0.0
        %1760 = vmatprep.subr.mxu0 0.0
        %1761 = vmatpush2.msra.mxu0 0.0
        %1762 = vmatprep.subr.mxu0 0.0
        %1763 = vmatpush2.msra.mxu0 0.0
        %1764 = vmatprep.subr.mxu0 0.0
        %1765 = vmatpush2.msra.mxu0 0.0
        %1766 = vmatprep.subr.mxu0 0.0
        %1767 = vmatpush2.msra.mxu0 0.0
        %1768 = vmatprep.mubr.f32.mxu0 0.0
        %1769 = vmatmul.mubr.f32.gmra.mxu0 %v1699
        %v1770 = vpop.f32.mrf.mxu0
        %v1771 = vadd.f32 %v1696, %v1770
        %v1772 = vpop.f32.mrf.mxu0
        %1773 = vmatprep.mubr.f32.mxu0 0.0
        %1774 = vmatmul.mubr.f32.gmra.mxu0 %v1702
        %v1775 = vpop.f32.mrf.mxu0
        %v1776 = vadd.f32 %v1696, %v1775
        %v1777 = vpop.f32.mrf.mxu0
        %1778 = vdwg.mxu0
        %vm1779 = vcmask 31744
        %1780 = vst.msk [vmem:[%s360] sm:$0xff] %vm1779, %v1771
        %1781 = vst.msk [vmem:[%s360 + $0x8] sm:$0xff] %vm1779, %v1776
        %s1782 = sand.u32 %s196, 1
        %s1783 = sand.u32 %s196, 1
        %s1784 = smul.addr %s1783, 16
        %s1785 = scalar_lea.vmem [#allocation9], %s1784
        // Predicated region
        $region99: #{tpu_custom_call.1} parent=81 // pred_check
          %p1786 = pneg %p206
        $region100: #{tpu_custom_call.1} parent=81 // pred_check_branch
          %1788 = sbr.rel (%p1786) target = $region102
        $region101: #{tpu_custom_call.1} parent=81 // pred_region
          %s1789 = smul.u32 2, %s24
          %s1790 = smul.addr %s1789, 2
          %s1791 = sadd.s32 %s25, %s1790
          %s1792 = smul.addr %s1791, 8
          %s1793 = scalar_lea.vmem %s7, %s1792
          // Predicated region
          $region103: #{tpu_custom_call.1} parent=101 // pred_check
            _
          $region104: #{tpu_custom_call.1} parent=101 // pred_check_branch
            %1795 = sbr.rel (0) target = $region106
          $region105: #{tpu_custom_call.1} parent=101 // pred_region
            // Predicated region
            $region107: #{tpu_custom_call.1} parent=105 // pred_check
              _
            $region108: #{tpu_custom_call.1} parent=105 // pred_check_branch
              %1797 = sbr.rel (0) target = $region110
            $region109: #{tpu_custom_call.1} parent=105 // pred_region
              // Predicated region
              $region122: #{tpu_custom_call.1} parent=109 // pred_check
                _
              $region123: #{tpu_custom_call.1} parent=109 // pred_check_branch
                %1815 = sbr.rel (0) target = $region125
              $region124: #{tpu_custom_call.1} parent=109 // pred_region
                loop: start=0, step=1, limit=1
                $region126: #{tpu_custom_call.1} parent=124 // loop_pre_header
                  _
                $region127: #{tpu_custom_call.1} parent=124 // loop_header
                  %s1817 = sphi 0, %s1821
                  %p1818 = scmp.ge.s32.totalorder %s1817, 1
                  %s1822 = sphi %s1785, %s1785
                  %s1823 = sphi %s1793, %s1793
                $region128: #{tpu_custom_call.1} parent=124 // loop_header_branch
                  %1820 = sbr.rel (%p1818) target = $region132
                $region129: #{tpu_custom_call.1} parent=124 // loop_body
                  %v1824 = vld [vmem:[%s1822] sm:$0xff]
                  %1825 = vst [vmem:[%s1823] sm:$0xff] %v1824
                  %v1826 = vld [vmem:[%s1822 + $0x8] sm:$0xff]
                  %1827 = vst [vmem:[%s1823 + $0x10] sm:$0xff] %v1826
                $region130: #{tpu_custom_call.1} parent=124 // loop_footer
                  %s1821 = sadd.s32 1, %s1817
                $region131: #{tpu_custom_call.1} parent=124 // loop_footer_branch
                  %1816 = sbr.rel target = $region127
                $region132: #{tpu_custom_call.1} parent=124 // loop_exit
                  _
              $region125: #{tpu_custom_call.1} parent=109 // pred_fallthru
                _
              // Predicated region
              $region133: #{tpu_custom_call.1} parent=109 // pred_check
                _
              $region134: #{tpu_custom_call.1} parent=109 // pred_check_branch
                %1829 = sbr.rel target = $region136
              $region135: #{tpu_custom_call.1} parent=109 // pred_region
                _
              $region136: #{tpu_custom_call.1} parent=109 // pred_fallthru
                _
            $region110: #{tpu_custom_call.1} parent=105 // pred_fallthru
              _
            // Predicated region
            $region111: #{tpu_custom_call.1} parent=105 // pred_check
              _
            $region112: #{tpu_custom_call.1} parent=105 // pred_check_branch
              %1799 = sbr.rel target = $region114
            $region113: #{tpu_custom_call.1} parent=105 // pred_region
              %s1801 = ssub.s32 256, 1
              loop: start=0, step=1, limit=1
              $region115: #{tpu_custom_call.1} parent=113 // loop_pre_header
                _
              $region116: #{tpu_custom_call.1} parent=113 // loop_header
                %s1803 = sphi 0, %s1807
                %p1804 = scmp.ge.s32.totalorder %s1803, 1
                %s1808 = sphi %s1785, %s1785
                %s1809 = sphi %s1793, %s1793
              $region117: #{tpu_custom_call.1} parent=113 // loop_header_branch
                %1806 = sbr.rel (%p1804) target = $region121
              $region118: #{tpu_custom_call.1} parent=113 // loop_body
                %v1810 = vld [vmem:[%s1808] sm:%s1801]
                %1811 = vst [vmem:[%s1809] sm:%s1801] %v1810
                %v1812 = vld [vmem:[%s1808 + $0x8] sm:%s1801]
                %1813 = vst [vmem:[%s1809 + $0x10] sm:%s1801] %v1812
              $region119: #{tpu_custom_call.1} parent=113 // loop_footer
                %s1807 = sadd.s32 1, %s1803
              $region120: #{tpu_custom_call.1} parent=113 // loop_footer_branch
                %1802 = sbr.rel target = $region116
              $region121: #{tpu_custom_call.1} parent=113 // loop_exit
                _
            $region114: #{tpu_custom_call.1} parent=105 // pred_fallthru
              _
          $region106: #{tpu_custom_call.1} parent=101 // pred_fallthru
            _
          %1830 = vnop
        $region102: #{tpu_custom_call.1} parent=81 // pred_fallthru
          _
      $region82: #{tpu_custom_call.1} parent=5 // pred_fallthru
        _
      %p1831 = scmp.le.s32.totalorder 2, %s15
      // Predicated region
      $region137: #{tpu_custom_call.1} parent=5 // pred_check
        %p1832 = pneg %p1831
      $region138: #{tpu_custom_call.1} parent=5 // pred_check_branch
        %1834 = sbr.rel (%p1832) target = $region140
      $region139: #{tpu_custom_call.1} parent=5 // pred_region
        %s1835 = ssub.s32 %s15, 2
        // Predicated region
        $region141: #{tpu_custom_call.1} parent=139 // pred_check
          %p1836 = pneg %p212
        $region142: #{tpu_custom_call.1} parent=139 // pred_check_branch
          %1838 = sbr.rel (%p1836) target = $region144
        $region143: #{tpu_custom_call.1} parent=139 // pred_region
          %s1839 = sand.u32 %s197, 1
          %s1840 = sand.u32 %s197, 1
          %s1841 = smul.addr %s1840, 16
          %s1842 = scalar_lea.vmem [#allocation9], %s1841
        $region144: #{tpu_custom_call.1} parent=139 // pred_fallthru
          _
      $region140: #{tpu_custom_call.1} parent=5 // pred_fallthru
        _
    $region6: #{tpu_custom_call.1} parent=1 // loop_footer
      %s19 = sadd.s32 1, %s15
    $region7: #{tpu_custom_call.1} parent=1 // loop_footer_branch
      %14 = sbr.rel target = $region3
    $region8: #{tpu_custom_call.1} parent=1 // loop_exit
      _
    %1843 = vsyncpa [#allocation6], 1
    %s1844 = scalar_lea.sflag [#allocation6], 1
    %1845 = vsyncpa %s1844, 1
    %1846 = vsyncpa [#allocation8], 1

</llo_original>
